<compile_context>
chip_gen: v7x
topology: tpu7x:2x2x1
jax: 0.10.0
libtpu: 0.0.40
codegen_flags: <defaults>
</compile_context>

<pallas_src>
import jax
import jax.numpy as jnp
from jax.experimental import pallas as pl
from jax.experimental.pallas import tpu as pltpu

N_BATCH = 10      # forced by the hard-coded self.batch_size = 10 in the module
L_FEAT = 12       # Conv1d length == GRU input_size
LANES = 128       # feature axis zero-padded to one full lane tile
HID = 20
NLAYERS = 3
NDIR = 2
GRU_OUT = 128
EPS = 1e-5

NBN = 10                              # bnlayer + 3 BN per residual block * 3 blocks
NCONV = 9                             # 3 convs per residual block * 3 blocks
GATES = 3 * LANES                     # gate order r | z | n, each a 128-lane block
W_SLABS = 2 * NLAYERS + 1             # (wx, wh) per GRU layer + FC weight
VEC_ROWS = NBN + 2 * NLAYERS + 1      # BN rows + (bx, bh) per layer + FC bias

VMEM_SPEC = pl.BlockSpec(memory_space=pltpu.MemorySpace.VMEM)
SMEM_SPEC = pl.BlockSpec(memory_space=pltpu.MemorySpace.SMEM)


# ----------------------------------------------------------------------------
# Single fused kernel: bnlayer + 3 x RESblock1 + 3-layer bi-GRU (seq len 1)
#                      + (identity) attention + gru_fc1.
# ----------------------------------------------------------------------------
def _rganet1_kernel(taps_ref,          # SMEM (27,)  f32: 9 convs x 3 taps
                    x_ref,             # VMEM (B,12) f32
                    h0_ref,            # VMEM (NLAYERS,B,40) f32: [fwd|bwd] per layer
                    w_ref,             # VMEM (7,128,384) bf16: wx0,wh0,wx1,wh1,wx2,wh2,fc
                    vec_ref,           # VMEM (17,384) f32: BN scale|shift rows, biases
                    o_ref,             # VMEM (B,128) f32
                    pad_ref):          # VMEM scratch (1+NLAYERS, B, 128) f32
    # ---- widen x (B,12) and the per-layer h0 (B,40) to zero-padded 128-lane slabs ----
    pad_ref[...] = jnp.zeros_like(pad_ref)
    pad_ref[0, :, 0:L_FEAT] = x_ref[...]
    for l in range(NLAYERS):
        pad_ref[1 + l, :, 0:NDIR * HID] = h0_ref[l]

    def affine(v, i):
        # eval-mode BatchNorm1d(1) affine; scale/shift rows are exactly 0 on lanes >= 12,
        # so padding lanes stay 0 (the FIR roll wrap-around relies on this invariant).
        return v * vec_ref[i:i + 1, 0:LANES] + vec_ref[i:i + 1, LANES:2 * LANES]

    def fir(v, c):
        # Conv1d(1,1,k=3,pad=1): out[l] = w0*v[l-1] + w1*v[l] + w2*v[l+1] (zero pad).
        v_prev = pltpu.roll(v, shift=1, axis=1)          # lane 0 gets v[:,127] == 0 (pad)
        v_next = pltpu.roll(v, shift=LANES - 1, axis=1)  # wrap junk lands only in lane 127
        return (taps_ref[3 * c + 0] * v_prev
                + taps_ref[3 * c + 1] * v
                + taps_ref[3 * c + 2] * v_next)

    # ---- frontend: bnlayer + block1..block3 (RESblock1, identity shortcut) ----
    h = affine(pad_ref[0], 0)                            # self.bnlayer
    for blk in range(3):
        inp = h
        t = jnp.maximum(affine(fir(inp, 3 * blk + 0), 1 + 3 * blk + 0), 0.0)
        t = affine(fir(t, 3 * blk + 1), 1 + 3 * blk + 1)
        t = affine(fir(t, 3 * blk + 2), 1 + 3 * blk + 2)
        h = jnp.maximum(t + inp, 0.0)                    # shortcut + relu

    # ---- 3-layer bidirectional GRU, sequence length 1 (batch_first) ----
    # Hidden layout: lanes [0:20] forward dir, [20:40] backward dir, [40:128] zero pad.
    # One fused dot per path; gate g lives in lanes [g*128 : g*128+40] of the result
    # (weight columns / biases outside that range are zero, so junk lanes stay benign).
    def gru_layer(xin, layer):
        hcat = pad_ref[1 + layer]                        # (B,128), lanes 40: are 0
        gx = jnp.dot(xin.astype(jnp.bfloat16), w_ref[2 * layer],
                     preferred_element_type=jnp.float32) \
            + vec_ref[NBN + 2 * layer:NBN + 2 * layer + 1, :]
        gh = jnp.dot(hcat.astype(jnp.bfloat16), w_ref[2 * layer + 1],
                     preferred_element_type=jnp.float32) \
            + vec_ref[NBN + 2 * layer + 1:NBN + 2 * layer + 2, :]
        r = jax.nn.sigmoid(gx[:, 0:LANES] + gh[:, 0:LANES])
        z = jax.nn.sigmoid(gx[:, LANES:2 * LANES] + gh[:, LANES:2 * LANES])
        n = jnp.tanh(gx[:, 2 * LANES:3 * LANES] + r * gh[:, 2 * LANES:3 * LANES])
        return (1.0 - z) * n + z * hcat                  # padding lanes remain 0

    g = h                                                # frontend output, lanes >= 12 are 0
    for layer in range(NLAYERS):
        # TODO(synk): nn.GRU inter-layer dropout (p=0.1) and nn.Dropout are identity in eval mode.
        g = gru_layer(g, layer)

    # ---- attention + gru_fc1 ----
    # softmax over the length-1 sequence axis is identically 1, so scored_x == out and
    # feat == out: the w_omega/u_omega/tanh branch is dead compute (and a NaN hazard)
    # and is omitted.  Only the (128,128) FC remains; its (B,128) output is the single
    # lane-dense HBM store.
    wfc = w_ref[2 * NLAYERS, :, 0:GRU_OUT]
    bfc = vec_ref[NBN + 2 * NLAYERS:NBN + 2 * NLAYERS + 1, 0:GRU_OUT]
    o_ref[...] = jnp.dot(g.astype(jnp.bfloat16), wfc,
                         preferred_element_type=jnp.float32) + bfc


# ----------------------------------------------------------------------------
# Parameter setup (deterministic, packed for the fused kernel)
# ----------------------------------------------------------------------------
def init_params(key):
    keys = iter(jax.random.split(key, 64))

    def u(shape, lo, hi):
        return jax.random.uniform(next(keys), shape, jnp.float32, lo, hi)

    # --- 10 BatchNorm1d(1) layers (eval-mode affine) -> per-lane masked scale/shift rows
    gamma = u((NBN,), 0.5, 1.5)
    beta = u((NBN,), -0.5, 0.5)
    rmean = u((NBN,), -0.5, 0.5)
    rvar = u((NBN,), 0.5, 1.5)
    scale = gamma / jnp.sqrt(rvar + EPS)
    shift = beta - rmean * scale
    lane_mask = (jnp.arange(LANES) < L_FEAT).astype(jnp.float32)   # 0 on lanes >= 12

    vecs = jnp.zeros((VEC_ROWS, GATES), jnp.float32)
    vecs = vecs.at[0:NBN, 0:LANES].set(scale[:, None] * lane_mask[None, :])
    vecs = vecs.at[0:NBN, LANES:2 * LANES].set(shift[:, None] * lane_mask[None, :])

    # --- 9 Conv1d(1,1,3,pad=1,bias=False) taps, flattened for SMEM
    taps = u((NCONV, 3), -0.5, 0.5).reshape(-1)                    # (27,)

    # --- GRU(12, 20, 3 layers, bidirectional) + gru_fc1, packed for the fused kernel:
    #     W[2l]   x-path  (128, 3*128): rows = input feature, gate g, dir d at
    #                                    columns [g*128 + d*20 : g*128 + (d+1)*20]
    #     W[2l+1] h-path  (128, 3*128): block-diagonal per direction
    #     W[6]    gru_fc1 weight^T in [:, 0:128]; unused rows/cols are zero.
    k_gru = 1.0 / float(HID) ** 0.5
    W = jnp.zeros((W_SLABS, LANES, GATES), jnp.float32)
    for layer in range(NLAYERS):
        in_feat = L_FEAT if layer == 0 else NDIR * HID
        for d in range(NDIR):                      # 0: forward, 1: backward (reverse)
            w_ih = u((3 * HID, in_feat), -k_gru, k_gru)   # PyTorch layout, gate order r|z|n
            w_hh = u((3 * HID, HID), -k_gru, k_gru)
            b_ih = u((3 * HID,), -k_gru, k_gru)
            b_hh = u((3 * HID,), -k_gru, k_gru)
            for g in range(3):
                rows = slice(g * HID, (g + 1) * HID)
                c0 = g * LANES + d * HID
                W = W.at[2 * layer, 0:in_feat, c0:c0 + HID].set(w_ih[rows].T)
                W = W.at[2 * layer + 1, d * HID:(d + 1) * HID, c0:c0 + HID].set(w_hh[rows].T)
                vecs = vecs.at[NBN + 2 * layer, c0:c0 + HID].set(b_ih[rows])
                vecs = vecs.at[NBN + 2 * layer + 1, c0:c0 + HID].set(b_hh[rows])

    # w_omega / u_omega / decoder are not materialized: with seq_len == 1 the attention
    # softmax is identically 1 (the branch cancels in the forward) and decoder is unused.
    k_fc = 1.0 / float(NDIR * HID) ** 0.5
    w_fc = u((GRU_OUT, NDIR * HID), -k_fc, k_fc)          # PyTorch Linear layout (out, in)
    b_fc = u((GRU_OUT,), -k_fc, k_fc)
    W = W.at[2 * NLAYERS, 0:NDIR * HID, 0:GRU_OUT].set(w_fc.T)
    vecs = vecs.at[NBN + 2 * NLAYERS, 0:GRU_OUT].set(b_fc)

    return {"taps": taps, "W": W.astype(jnp.bfloat16), "vecs": vecs}


# ----------------------------------------------------------------------------
# Forward: one jitted wrapper around a single pallas_call (no wrapper-side packing)
# ----------------------------------------------------------------------------
@jax.jit
def rganet1_forward(params, x, h0):
    # x:  (N, 1, L) like the PyTorch NCL input (single channel)
    # h0: (NLAYERS, N, 2*HID) — per layer [forward | backward] concatenated; the module
    #     draws this with torch.rand inside forward, so the fused layout is free.
    B = x.shape[0]
    x2d = x.reshape(B, L_FEAT)                 # squeeze the single channel
    return pl.pallas_call(
        _rganet1_kernel,
        out_shape=jax.ShapeDtypeStruct((B, GRU_OUT), jnp.float32),
        in_specs=[SMEM_SPEC, VMEM_SPEC, VMEM_SPEC, VMEM_SPEC, VMEM_SPEC],
        out_specs=VMEM_SPEC,
        scratch_shapes=[pltpu.VMEM((1 + NLAYERS, B, LANES), jnp.float32)],
    )(params["taps"], x2d, h0, params["W"], params["vecs"])


if __name__ == "__main__":
    key = jax.random.PRNGKey(0)
    kx, kh = jax.random.split(key)
    x = jax.random.normal(kx, (N_BATCH, 1, L_FEAT), jnp.float32)
    # the module draws its initial hidden state with torch.rand inside forward; it is
    # generated here directly in the fused (layer, batch, [fwd|bwd]) layout
    h0 = jax.random.uniform(kh, (NLAYERS, N_BATCH, NDIR * HID), jnp.float32)

    params = init_params(jax.random.PRNGKey(42))
    out = rganet1_forward(params, x, h0)
    out = jax.block_until_ready(out)
    assert out.shape == (N_BATCH, GRU_OUT) and out.dtype == jnp.float32
    print("KERNEL_OK")
</pallas_src>

<mosaic_0001>
module attributes {stable_mosaic.version = 11 : i64} {
  func.func @_rganet1_kernel(%arg0: memref<27xf32, #tpu.memory_space<smem>>, %arg1: memref<10x12xf32, #tpu.memory_space<vmem>>, %arg2: memref<3x10x40xf32, #tpu.memory_space<vmem>>, %arg3: memref<7x128x384xbf16, #tpu.memory_space<vmem>>, %arg4: memref<17x384xf32, #tpu.memory_space<vmem>>, %arg5: memref<10x128xf32, #tpu.memory_space<vmem>>, %arg6: memref<4x10x128xf32, #tpu.memory_space<vmem>>) attributes {dimension_semantics = [], scalar_prefetch = 0 : i64, scratch_operands = 1 : i64, tpu.core_type = #tpu.core_type<tc>} {
    %cst = arith.constant 0.000000e+00 : f32
    %0 = vector.broadcast %cst : f32 to vector<4x10x128xf32>
    %c0 = arith.constant 0 : index
    %c0_0 = arith.constant 0 : index
    %c0_1 = arith.constant 0 : index
    %1 = vector.load %arg6[%c0, %c0_0, %c0_1] : memref<4x10x128xf32, #tpu.memory_space<vmem>>, vector<4x10x128xf32>
    tpu.vector_store %arg6[%c0, %c0_0, %c0_1], %0 {strides = array<i32>} : memref<4x10x128xf32, #tpu.memory_space<vmem>>, vector<4x10x128xf32>,
    %c0_2 = arith.constant 0 : index
    %c0_3 = arith.constant 0 : index
    %2 = vector.load %arg1[%c0_2, %c0_3] : memref<10x12xf32, #tpu.memory_space<vmem>>, vector<10x12xf32>
    %c0_4 = arith.constant 0 : index
    %c0_5 = arith.constant 0 : index
    %c0_6 = arith.constant 0 : index
    %3 = vector.load %arg6[%c0_4, %c0_5, %c0_6] : memref<4x10x128xf32, #tpu.memory_space<vmem>>, vector<1x10x12xf32>
    %4 = vector.shape_cast %3 : vector<1x10x12xf32> to vector<10x12xf32>
    %5 = vector.shape_cast %2 : vector<10x12xf32> to vector<1x10x12xf32>
    tpu.vector_store %arg6[%c0_4, %c0_5, %c0_6], %5 {strides = array<i32>} : memref<4x10x128xf32, #tpu.memory_space<vmem>>, vector<1x10x12xf32>,
    %c0_7 = arith.constant 0 : index
    %c0_8 = arith.constant 0 : index
    %c0_9 = arith.constant 0 : index
    %6 = vector.load %arg2[%c0_7, %c0_8, %c0_9] : memref<3x10x40xf32, #tpu.memory_space<vmem>>, vector<1x10x40xf32>
    %7 = vector.shape_cast %6 : vector<1x10x40xf32> to vector<10x40xf32>
    %c1 = arith.constant 1 : index
    %c0_10 = arith.constant 0 : index
    %c0_11 = arith.constant 0 : index
    %8 = vector.load %arg6[%c1, %c0_10, %c0_11] : memref<4x10x128xf32, #tpu.memory_space<vmem>>, vector<1x10x40xf32>
    %9 = vector.shape_cast %8 : vector<1x10x40xf32> to vector<10x40xf32>
    %10 = vector.shape_cast %7 : vector<10x40xf32> to vector<1x10x40xf32>
    tpu.vector_store %arg6[%c1, %c0_10, %c0_11], %10 {strides = array<i32>} : memref<4x10x128xf32, #tpu.memory_space<vmem>>, vector<1x10x40xf32>,
    %c1_12 = arith.constant 1 : index
    %c0_13 = arith.constant 0 : index
    %c0_14 = arith.constant 0 : index
    %11 = vector.load %arg2[%c1_12, %c0_13, %c0_14] : memref<3x10x40xf32, #tpu.memory_space<vmem>>, vector<1x10x40xf32>
    %12 = vector.shape_cast %11 : vector<1x10x40xf32> to vector<10x40xf32>
    %c2 = arith.constant 2 : index
    %c0_15 = arith.constant 0 : index
    %c0_16 = arith.constant 0 : index
    %13 = vector.load %arg6[%c2, %c0_15, %c0_16] : memref<4x10x128xf32, #tpu.memory_space<vmem>>, vector<1x10x40xf32>
    %14 = vector.shape_cast %13 : vector<1x10x40xf32> to vector<10x40xf32>
    %15 = vector.shape_cast %12 : vector<10x40xf32> to vector<1x10x40xf32>
    tpu.vector_store %arg6[%c2, %c0_15, %c0_16], %15 {strides = array<i32>} : memref<4x10x128xf32, #tpu.memory_space<vmem>>, vector<1x10x40xf32>,
    %c2_17 = arith.constant 2 : index
    %c0_18 = arith.constant 0 : index
    %c0_19 = arith.constant 0 : index
    %16 = vector.load %arg2[%c2_17, %c0_18, %c0_19] : memref<3x10x40xf32, #tpu.memory_space<vmem>>, vector<1x10x40xf32>
    %17 = vector.shape_cast %16 : vector<1x10x40xf32> to vector<10x40xf32>
    %c3 = arith.constant 3 : index
    %c0_20 = arith.constant 0 : index
    %c0_21 = arith.constant 0 : index
    %18 = vector.load %arg6[%c3, %c0_20, %c0_21] : memref<4x10x128xf32, #tpu.memory_space<vmem>>, vector<1x10x40xf32>
    %19 = vector.shape_cast %18 : vector<1x10x40xf32> to vector<10x40xf32>
    %20 = vector.shape_cast %17 : vector<10x40xf32> to vector<1x10x40xf32>
    tpu.vector_store %arg6[%c3, %c0_20, %c0_21], %20 {strides = array<i32>} : memref<4x10x128xf32, #tpu.memory_space<vmem>>, vector<1x10x40xf32>,
    %c0_22 = arith.constant 0 : index
    %c0_23 = arith.constant 0 : index
    %c0_24 = arith.constant 0 : index
    %21 = vector.load %arg6[%c0_22, %c0_23, %c0_24] : memref<4x10x128xf32, #tpu.memory_space<vmem>>, vector<1x10x128xf32>
    %22 = vector.shape_cast %21 : vector<1x10x128xf32> to vector<10x128xf32>
    %c0_25 = arith.constant 0 : index
    %c0_26 = arith.constant 0 : index
    %23 = vector.load %arg4[%c0_25, %c0_26] : memref<17x384xf32, #tpu.memory_space<vmem>>, vector<1x128xf32>
    %24 = vector.broadcast %23 : vector<1x128xf32> to vector<10x128xf32>
    %25 = arith.mulf %22, %24 : vector<10x128xf32>
    %c0_27 = arith.constant 0 : index
    %c128 = arith.constant 128 : index
    %26 = vector.load %arg4[%c0_27, %c128] : memref<17x384xf32, #tpu.memory_space<vmem>>, vector<1x128xf32>
    %27 = vector.broadcast %26 : vector<1x128xf32> to vector<10x128xf32>
    %28 = arith.addf %25, %27 : vector<10x128xf32>
    %c1_i32 = arith.constant 1 : i32
    %29 = tpu.dynamic_rotate %28 by %c1_i32 dim 1 : vector<10x128xf32>, i32 -> vector<10x128xf32>
    %c127_i32 = arith.constant 127 : i32
    %30 = tpu.dynamic_rotate %28 by %c127_i32 dim 1 : vector<10x128xf32>, i32 -> vector<10x128xf32>
    %c0_28 = arith.constant 0 : index
    %31 = memref.load %arg0[%c0_28] : memref<27xf32, #tpu.memory_space<smem>>
    %32 = vector.broadcast %31 : f32 to vector<10x128xf32>
    %33 = arith.mulf %32, %29 : vector<10x128xf32>
    %c1_29 = arith.constant 1 : index
    %34 = memref.load %arg0[%c1_29] : memref<27xf32, #tpu.memory_space<smem>>
    %35 = vector.broadcast %34 : f32 to vector<10x128xf32>
    %36 = arith.mulf %35, %28 : vector<10x128xf32>
    %37 = arith.addf %33, %36 : vector<10x128xf32>
    %c2_30 = arith.constant 2 : index
    %38 = memref.load %arg0[%c2_30] : memref<27xf32, #tpu.memory_space<smem>>
    %39 = vector.broadcast %38 : f32 to vector<10x128xf32>
    %40 = arith.mulf %39, %30 : vector<10x128xf32>
    %41 = arith.addf %37, %40 : vector<10x128xf32>
    %c1_31 = arith.constant 1 : index
    %c0_32 = arith.constant 0 : index
    %42 = vector.load %arg4[%c1_31, %c0_32] : memref<17x384xf32, #tpu.memory_space<vmem>>, vector<1x128xf32>
    %43 = vector.broadcast %42 : vector<1x128xf32> to vector<10x128xf32>
    %44 = arith.mulf %41, %43 : vector<10x128xf32>
    %c1_33 = arith.constant 1 : index
    %c128_34 = arith.constant 128 : index
    %45 = vector.load %arg4[%c1_33, %c128_34] : memref<17x384xf32, #tpu.memory_space<vmem>>, vector<1x128xf32>
    %46 = vector.broadcast %45 : vector<1x128xf32> to vector<10x128xf32>
    %47 = arith.addf %44, %46 : vector<10x128xf32>
    %cst_35 = arith.constant 0.000000e+00 : f32
    %48 = vector.broadcast %cst_35 : f32 to vector<10x128xf32>
    %49 = arith.maximumf %47, %48 : vector<10x128xf32>
    %c1_i32_36 = arith.constant 1 : i32
    %50 = tpu.dynamic_rotate %49 by %c1_i32_36 dim 1 : vector<10x128xf32>, i32 -> vector<10x128xf32>
    %c127_i32_37 = arith.constant 127 : i32
    %51 = tpu.dynamic_rotate %49 by %c127_i32_37 dim 1 : vector<10x128xf32>, i32 -> vector<10x128xf32>
    %c3_38 = arith.constant 3 : index
    %52 = memref.load %arg0[%c3_38] : memref<27xf32, #tpu.memory_space<smem>>
    %53 = vector.broadcast %52 : f32 to vector<10x128xf32>
    %54 = arith.mulf %53, %50 : vector<10x128xf32>
    %c4 = arith.constant 4 : index
    %55 = memref.load %arg0[%c4] : memref<27xf32, #tpu.memory_space<smem>>
    %56 = vector.broadcast %55 : f32 to vector<10x128xf32>
    %57 = arith.mulf %56, %49 : vector<10x128xf32>
    %58 = arith.addf %54, %57 : vector<10x128xf32>
    %c5 = arith.constant 5 : index
    %59 = memref.load %arg0[%c5] : memref<27xf32, #tpu.memory_space<smem>>
    %60 = vector.broadcast %59 : f32 to vector<10x128xf32>
    %61 = arith.mulf %60, %51 : vector<10x128xf32>
    %62 = arith.addf %58, %61 : vector<10x128xf32>
    %c2_39 = arith.constant 2 : index
    %c0_40 = arith.constant 0 : index
    %63 = vector.load %arg4[%c2_39, %c0_40] : memref<17x384xf32, #tpu.memory_space<vmem>>, vector<1x128xf32>
    %64 = vector.broadcast %63 : vector<1x128xf32> to vector<10x128xf32>
    %65 = arith.mulf %62, %64 : vector<10x128xf32>
    %c2_41 = arith.constant 2 : index
    %c128_42 = arith.constant 128 : index
    %66 = vector.load %arg4[%c2_41, %c128_42] : memref<17x384xf32, #tpu.memory_space<vmem>>, vector<1x128xf32>
    %67 = vector.broadcast %66 : vector<1x128xf32> to vector<10x128xf32>
    %68 = arith.addf %65, %67 : vector<10x128xf32>
    %c1_i32_43 = arith.constant 1 : i32
    %69 = tpu.dynamic_rotate %68 by %c1_i32_43 dim 1 : vector<10x128xf32>, i32 -> vector<10x128xf32>
    %c127_i32_44 = arith.constant 127 : i32
    %70 = tpu.dynamic_rotate %68 by %c127_i32_44 dim 1 : vector<10x128xf32>, i32 -> vector<10x128xf32>
    %c6 = arith.constant 6 : index
    %71 = memref.load %arg0[%c6] : memref<27xf32, #tpu.memory_space<smem>>
    %72 = vector.broadcast %71 : f32 to vector<10x128xf32>
    %73 = arith.mulf %72, %69 : vector<10x128xf32>
    %c7 = arith.constant 7 : index
    %74 = memref.load %arg0[%c7] : memref<27xf32, #tpu.memory_space<smem>>
    %75 = vector.broadcast %74 : f32 to vector<10x128xf32>
    %76 = arith.mulf %75, %68 : vector<10x128xf32>
    %77 = arith.addf %73, %76 : vector<10x128xf32>
    %c8 = arith.constant 8 : index
    %78 = memref.load %arg0[%c8] : memref<27xf32, #tpu.memory_space<smem>>
    %79 = vector.broadcast %78 : f32 to vector<10x128xf32>
    %80 = arith.mulf %79, %70 : vector<10x128xf32>
    %81 = arith.addf %77, %80 : vector<10x128xf32>
    %c3_45 = arith.constant 3 : index
    %c0_46 = arith.constant 0 : index
    %82 = vector.load %arg4[%c3_45, %c0_46] : memref<17x384xf32, #tpu.memory_space<vmem>>, vector<1x128xf32>
    %83 = vector.broadcast %82 : vector<1x128xf32> to vector<10x128xf32>
    %84 = arith.mulf %81, %83 : vector<10x128xf32>
    %c3_47 = arith.constant 3 : index
    %c128_48 = arith.constant 128 : index
    %85 = vector.load %arg4[%c3_47, %c128_48] : memref<17x384xf32, #tpu.memory_space<vmem>>, vector<1x128xf32>
    %86 = vector.broadcast %85 : vector<1x128xf32> to vector<10x128xf32>
    %87 = arith.addf %84, %86 : vector<10x128xf32>
    %88 = arith.addf %87, %28 : vector<10x128xf32>
    %cst_49 = arith.constant 0.000000e+00 : f32
    %89 = vector.broadcast %cst_49 : f32 to vector<10x128xf32>
    %90 = arith.maximumf %88, %89 : vector<10x128xf32>
    %c1_i32_50 = arith.constant 1 : i32
    %91 = tpu.dynamic_rotate %90 by %c1_i32_50 dim 1 : vector<10x128xf32>, i32 -> vector<10x128xf32>
    %c127_i32_51 = arith.constant 127 : i32
    %92 = tpu.dynamic_rotate %90 by %c127_i32_51 dim 1 : vector<10x128xf32>, i32 -> vector<10x128xf32>
    %c9 = arith.constant 9 : index
    %93 = memref.load %arg0[%c9] : memref<27xf32, #tpu.memory_space<smem>>
    %94 = vector.broadcast %93 : f32 to vector<10x128xf32>
    %95 = arith.mulf %94, %91 : vector<10x128xf32>
    %c10 = arith.constant 10 : index
    %96 = memref.load %arg0[%c10] : memref<27xf32, #tpu.memory_space<smem>>
    %97 = vector.broadcast %96 : f32 to vector<10x128xf32>
    %98 = arith.mulf %97, %90 : vector<10x128xf32>
    %99 = arith.addf %95, %98 : vector<10x128xf32>
    %c11 = arith.constant 11 : index
    %100 = memref.load %arg0[%c11] : memref<27xf32, #tpu.memory_space<smem>>
    %101 = vector.broadcast %100 : f32 to vector<10x128xf32>
    %102 = arith.mulf %101, %92 : vector<10x128xf32>
    %103 = arith.addf %99, %102 : vector<10x128xf32>
    %c4_52 = arith.constant 4 : index
    %c0_53 = arith.constant 0 : index
    %104 = vector.load %arg4[%c4_52, %c0_53] : memref<17x384xf32, #tpu.memory_space<vmem>>, vector<1x128xf32>
    %105 = vector.broadcast %104 : vector<1x128xf32> to vector<10x128xf32>
    %106 = arith.mulf %103, %105 : vector<10x128xf32>
    %c4_54 = arith.constant 4 : index
    %c128_55 = arith.constant 128 : index
    %107 = vector.load %arg4[%c4_54, %c128_55] : memref<17x384xf32, #tpu.memory_space<vmem>>, vector<1x128xf32>
    %108 = vector.broadcast %107 : vector<1x128xf32> to vector<10x128xf32>
    %109 = arith.addf %106, %108 : vector<10x128xf32>
    %cst_56 = arith.constant 0.000000e+00 : f32
    %110 = vector.broadcast %cst_56 : f32 to vector<10x128xf32>
    %111 = arith.maximumf %109, %110 : vector<10x128xf32>
    %c1_i32_57 = arith.constant 1 : i32
    %112 = tpu.dynamic_rotate %111 by %c1_i32_57 dim 1 : vector<10x128xf32>, i32 -> vector<10x128xf32>
    %c127_i32_58 = arith.constant 127 : i32
    %113 = tpu.dynamic_rotate %111 by %c127_i32_58 dim 1 : vector<10x128xf32>, i32 -> vector<10x128xf32>
    %c12 = arith.constant 12 : index
    %114 = memref.load %arg0[%c12] : memref<27xf32, #tpu.memory_space<smem>>
    %115 = vector.broadcast %114 : f32 to vector<10x128xf32>
    %116 = arith.mulf %115, %112 : vector<10x128xf32>
    %c13 = arith.constant 13 : index
    %117 = memref.load %arg0[%c13] : memref<27xf32, #tpu.memory_space<smem>>
    %118 = vector.broadcast %117 : f32 to vector<10x128xf32>
    %119 = arith.mulf %118, %111 : vector<10x128xf32>
    %120 = arith.addf %116, %119 : vector<10x128xf32>
    %c14 = arith.constant 14 : index
    %121 = memref.load %arg0[%c14] : memref<27xf32, #tpu.memory_space<smem>>
    %122 = vector.broadcast %121 : f32 to vector<10x128xf32>
    %123 = arith.mulf %122, %113 : vector<10x128xf32>
    %124 = arith.addf %120, %123 : vector<10x128xf32>
    %c5_59 = arith.constant 5 : index
    %c0_60 = arith.constant 0 : index
    %125 = vector.load %arg4[%c5_59, %c0_60] : memref<17x384xf32, #tpu.memory_space<vmem>>, vector<1x128xf32>
    %126 = vector.broadcast %125 : vector<1x128xf32> to vector<10x128xf32>
    %127 = arith.mulf %124, %126 : vector<10x128xf32>
    %c5_61 = arith.constant 5 : index
    %c128_62 = arith.constant 128 : index
    %128 = vector.load %arg4[%c5_61, %c128_62] : memref<17x384xf32, #tpu.memory_space<vmem>>, vector<1x128xf32>
    %129 = vector.broadcast %128 : vector<1x128xf32> to vector<10x128xf32>
    %130 = arith.addf %127, %129 : vector<10x128xf32>
    %c1_i32_63 = arith.constant 1 : i32
    %131 = tpu.dynamic_rotate %130 by %c1_i32_63 dim 1 : vector<10x128xf32>, i32 -> vector<10x128xf32>
    %c127_i32_64 = arith.constant 127 : i32
    %132 = tpu.dynamic_rotate %130 by %c127_i32_64 dim 1 : vector<10x128xf32>, i32 -> vector<10x128xf32>
    %c15 = arith.constant 15 : index
    %133 = memref.load %arg0[%c15] : memref<27xf32, #tpu.memory_space<smem>>
    %134 = vector.broadcast %133 : f32 to vector<10x128xf32>
    %135 = arith.mulf %134, %131 : vector<10x128xf32>
    %c16 = arith.constant 16 : index
    %136 = memref.load %arg0[%c16] : memref<27xf32, #tpu.memory_space<smem>>
    %137 = vector.broadcast %136 : f32 to vector<10x128xf32>
    %138 = arith.mulf %137, %130 : vector<10x128xf32>
    %139 = arith.addf %135, %138 : vector<10x128xf32>
    %c17 = arith.constant 17 : index
    %140 = memref.load %arg0[%c17] : memref<27xf32, #tpu.memory_space<smem>>
    %141 = vector.broadcast %140 : f32 to vector<10x128xf32>
    %142 = arith.mulf %141, %132 : vector<10x128xf32>
    %143 = arith.addf %139, %142 : vector<10x128xf32>
    %c6_65 = arith.constant 6 : index
    %c0_66 = arith.constant 0 : index
    %144 = vector.load %arg4[%c6_65, %c0_66] : memref<17x384xf32, #tpu.memory_space<vmem>>, vector<1x128xf32>
    %145 = vector.broadcast %144 : vector<1x128xf32> to vector<10x128xf32>
    %146 = arith.mulf %143, %145 : vector<10x128xf32>
    %c6_67 = arith.constant 6 : index
    %c128_68 = arith.constant 128 : index
    %147 = vector.load %arg4[%c6_67, %c128_68] : memref<17x384xf32, #tpu.memory_space<vmem>>, vector<1x128xf32>
    %148 = vector.broadcast %147 : vector<1x128xf32> to vector<10x128xf32>
    %149 = arith.addf %146, %148 : vector<10x128xf32>
    %150 = arith.addf %149, %90 : vector<10x128xf32>
    %cst_69 = arith.constant 0.000000e+00 : f32
    %151 = vector.broadcast %cst_69 : f32 to vector<10x128xf32>
    %152 = arith.maximumf %150, %151 : vector<10x128xf32>
    %c1_i32_70 = arith.constant 1 : i32
    %153 = tpu.dynamic_rotate %152 by %c1_i32_70 dim 1 : vector<10x128xf32>, i32 -> vector<10x128xf32>
    %c127_i32_71 = arith.constant 127 : i32
    %154 = tpu.dynamic_rotate %152 by %c127_i32_71 dim 1 : vector<10x128xf32>, i32 -> vector<10x128xf32>
    %c18 = arith.constant 18 : index
    %155 = memref.load %arg0[%c18] : memref<27xf32, #tpu.memory_space<smem>>
    %156 = vector.broadcast %155 : f32 to vector<10x128xf32>
    %157 = arith.mulf %156, %153 : vector<10x128xf32>
    %c19 = arith.constant 19 : index
    %158 = memref.load %arg0[%c19] : memref<27xf32, #tpu.memory_space<smem>>
    %159 = vector.broadcast %158 : f32 to vector<10x128xf32>
    %160 = arith.mulf %159, %152 : vector<10x128xf32>
    %161 = arith.addf %157, %160 : vector<10x128xf32>
    %c20 = arith.constant 20 : index
    %162 = memref.load %arg0[%c20] : memref<27xf32, #tpu.memory_space<smem>>
    %163 = vector.broadcast %162 : f32 to vector<10x128xf32>
    %164 = arith.mulf %163, %154 : vector<10x128xf32>
    %165 = arith.addf %161, %164 : vector<10x128xf32>
    %c7_72 = arith.constant 7 : index
    %c0_73 = arith.constant 0 : index
    %166 = vector.load %arg4[%c7_72, %c0_73] : memref<17x384xf32, #tpu.memory_space<vmem>>, vector<1x128xf32>
    %167 = vector.broadcast %166 : vector<1x128xf32> to vector<10x128xf32>
    %168 = arith.mulf %165, %167 : vector<10x128xf32>
    %c7_74 = arith.constant 7 : index
    %c128_75 = arith.constant 128 : index
    %169 = vector.load %arg4[%c7_74, %c128_75] : memref<17x384xf32, #tpu.memory_space<vmem>>, vector<1x128xf32>
    %170 = vector.broadcast %169 : vector<1x128xf32> to vector<10x128xf32>
    %171 = arith.addf %168, %170 : vector<10x128xf32>
    %cst_76 = arith.constant 0.000000e+00 : f32
    %172 = vector.broadcast %cst_76 : f32 to vector<10x128xf32>
    %173 = arith.maximumf %171, %172 : vector<10x128xf32>
    %c1_i32_77 = arith.constant 1 : i32
    %174 = tpu.dynamic_rotate %173 by %c1_i32_77 dim 1 : vector<10x128xf32>, i32 -> vector<10x128xf32>
    %c127_i32_78 = arith.constant 127 : i32
    %175 = tpu.dynamic_rotate %173 by %c127_i32_78 dim 1 : vector<10x128xf32>, i32 -> vector<10x128xf32>
    %c21 = arith.constant 21 : index
    %176 = memref.load %arg0[%c21] : memref<27xf32, #tpu.memory_space<smem>>
    %177 = vector.broadcast %176 : f32 to vector<10x128xf32>
    %178 = arith.mulf %177, %174 : vector<10x128xf32>
    %c22 = arith.constant 22 : index
    %179 = memref.load %arg0[%c22] : memref<27xf32, #tpu.memory_space<smem>>
    %180 = vector.broadcast %179 : f32 to vector<10x128xf32>
    %181 = arith.mulf %180, %173 : vector<10x128xf32>
    %182 = arith.addf %178, %181 : vector<10x128xf32>
    %c23 = arith.constant 23 : index
    %183 = memref.load %arg0[%c23] : memref<27xf32, #tpu.memory_space<smem>>
    %184 = vector.broadcast %183 : f32 to vector<10x128xf32>
    %185 = arith.mulf %184, %175 : vector<10x128xf32>
    %186 = arith.addf %182, %185 : vector<10x128xf32>
    %c8_79 = arith.constant 8 : index
    %c0_80 = arith.constant 0 : index
    %187 = vector.load %arg4[%c8_79, %c0_80] : memref<17x384xf32, #tpu.memory_space<vmem>>, vector<1x128xf32>
    %188 = vector.broadcast %187 : vector<1x128xf32> to vector<10x128xf32>
    %189 = arith.mulf %186, %188 : vector<10x128xf32>
    %c8_81 = arith.constant 8 : index
    %c128_82 = arith.constant 128 : index
    %190 = vector.load %arg4[%c8_81, %c128_82] : memref<17x384xf32, #tpu.memory_space<vmem>>, vector<1x128xf32>
    %191 = vector.broadcast %190 : vector<1x128xf32> to vector<10x128xf32>
    %192 = arith.addf %189, %191 : vector<10x128xf32>
    %c1_i32_83 = arith.constant 1 : i32
    %193 = tpu.dynamic_rotate %192 by %c1_i32_83 dim 1 : vector<10x128xf32>, i32 -> vector<10x128xf32>
    %c127_i32_84 = arith.constant 127 : i32
    %194 = tpu.dynamic_rotate %192 by %c127_i32_84 dim 1 : vector<10x128xf32>, i32 -> vector<10x128xf32>
    %c24 = arith.constant 24 : index
    %195 = memref.load %arg0[%c24] : memref<27xf32, #tpu.memory_space<smem>>
    %196 = vector.broadcast %195 : f32 to vector<10x128xf32>
    %197 = arith.mulf %196, %193 : vector<10x128xf32>
    %c25 = arith.constant 25 : index
    %198 = memref.load %arg0[%c25] : memref<27xf32, #tpu.memory_space<smem>>
    %199 = vector.broadcast %198 : f32 to vector<10x128xf32>
    %200 = arith.mulf %199, %192 : vector<10x128xf32>
    %201 = arith.addf %197, %200 : vector<10x128xf32>
    %c26 = arith.constant 26 : index
    %202 = memref.load %arg0[%c26] : memref<27xf32, #tpu.memory_space<smem>>
    %203 = vector.broadcast %202 : f32 to vector<10x128xf32>
    %204 = arith.mulf %203, %194 : vector<10x128xf32>
    %205 = arith.addf %201, %204 : vector<10x128xf32>
    %c9_85 = arith.constant 9 : index
    %c0_86 = arith.constant 0 : index
    %206 = vector.load %arg4[%c9_85, %c0_86] : memref<17x384xf32, #tpu.memory_space<vmem>>, vector<1x128xf32>
    %207 = vector.broadcast %206 : vector<1x128xf32> to vector<10x128xf32>
    %208 = arith.mulf %205, %207 : vector<10x128xf32>
    %c9_87 = arith.constant 9 : index
    %c128_88 = arith.constant 128 : index
    %209 = vector.load %arg4[%c9_87, %c128_88] : memref<17x384xf32, #tpu.memory_space<vmem>>, vector<1x128xf32>
    %210 = vector.broadcast %209 : vector<1x128xf32> to vector<10x128xf32>
    %211 = arith.addf %208, %210 : vector<10x128xf32>
    %212 = arith.addf %211, %152 : vector<10x128xf32>
    %cst_89 = arith.constant 0.000000e+00 : f32
    %213 = vector.broadcast %cst_89 : f32 to vector<10x128xf32>
    %214 = arith.maximumf %212, %213 : vector<10x128xf32>
    %c1_90 = arith.constant 1 : index
    %c0_91 = arith.constant 0 : index
    %c0_92 = arith.constant 0 : index
    %215 = vector.load %arg6[%c1_90, %c0_91, %c0_92] : memref<4x10x128xf32, #tpu.memory_space<vmem>>, vector<1x10x128xf32>
    %216 = vector.shape_cast %215 : vector<1x10x128xf32> to vector<10x128xf32>
    %217 = arith.truncf %214 : vector<10x128xf32> to vector<10x128xbf16>
    %c0_93 = arith.constant 0 : index
    %c0_94 = arith.constant 0 : index
    %c0_95 = arith.constant 0 : index
    %218 = vector.load %arg3[%c0_93, %c0_94, %c0_95] : memref<7x128x384xbf16, #tpu.memory_space<vmem>>, vector<1x128x384xbf16>
    %219 = vector.shape_cast %218 : vector<1x128x384xbf16> to vector<128x384xbf16>
    %cst_96 = arith.constant dense<0.000000e+00> : vector<10x384xf32>
    %220 = tpu.matmul %217, %219, %cst_96 {dimension_numbers = #tpu.dot_dimension_numbers<[1], [0], [0], [1], [0, 0, 1, 1], [], []>} : vector<10x128xbf16>, vector<128x384xbf16>, vector<10x384xf32> -> vector<10x384xf32>
    %c10_97 = arith.constant 10 : index
    %c0_98 = arith.constant 0 : index
    %221 = vector.load %arg4[%c10_97, %c0_98] : memref<17x384xf32, #tpu.memory_space<vmem>>, vector<1x384xf32>
    %222 = vector.broadcast %221 : vector<1x384xf32> to vector<10x384xf32>
    %223 = arith.addf %220, %222 : vector<10x384xf32>
    %224 = arith.truncf %216 : vector<10x128xf32> to vector<10x128xbf16>
    %c1_99 = arith.constant 1 : index
    %c0_100 = arith.constant 0 : index
    %c0_101 = arith.constant 0 : index
    %225 = vector.load %arg3[%c1_99, %c0_100, %c0_101] : memref<7x128x384xbf16, #tpu.memory_space<vmem>>, vector<1x128x384xbf16>
    %226 = vector.shape_cast %225 : vector<1x128x384xbf16> to vector<128x384xbf16>
    %cst_102 = arith.constant dense<0.000000e+00> : vector<10x384xf32>
    %227 = tpu.matmul %224, %226, %cst_102 {dimension_numbers = #tpu.dot_dimension_numbers<[1], [0], [0], [1], [0, 0, 1, 1], [], []>} : vector<10x128xbf16>, vector<128x384xbf16>, vector<10x384xf32> -> vector<10x384xf32>
    %c11_103 = arith.constant 11 : index
    %c0_104 = arith.constant 0 : index
    %228 = vector.load %arg4[%c11_103, %c0_104] : memref<17x384xf32, #tpu.memory_space<vmem>>, vector<1x384xf32>
    %229 = vector.broadcast %228 : vector<1x384xf32> to vector<10x384xf32>
    %230 = arith.addf %227, %229 : vector<10x384xf32>
    %231 = vector.extract_strided_slice %223 {offsets = [0, 0], sizes = [10, 128], strides = [1, 1]} : vector<10x384xf32> to vector<10x128xf32>
    %232 = vector.extract_strided_slice %230 {offsets = [0, 0], sizes = [10, 128], strides = [1, 1]} : vector<10x384xf32> to vector<10x128xf32>
    %233 = arith.addf %231, %232 : vector<10x128xf32>
    %234 = arith.negf %233 : vector<10x128xf32>
    %235 = math.exp %234 : vector<10x128xf32>
    %cst_105 = arith.constant 1.000000e+00 : f32
    %236 = vector.broadcast %cst_105 : f32 to vector<10x128xf32>
    %237 = arith.addf %236, %235 : vector<10x128xf32>
    %238 = arith.divf %236, %237 : vector<10x128xf32>
    %239 = vector.extract_strided_slice %223 {offsets = [0, 128], sizes = [10, 128], strides = [1, 1]} : vector<10x384xf32> to vector<10x128xf32>
    %240 = vector.extract_strided_slice %230 {offsets = [0, 128], sizes = [10, 128], strides = [1, 1]} : vector<10x384xf32> to vector<10x128xf32>
    %241 = arith.addf %239, %240 : vector<10x128xf32>
    %242 = arith.negf %241 : vector<10x128xf32>
    %243 = math.exp %242 : vector<10x128xf32>
    %cst_106 = arith.constant 1.000000e+00 : f32
    %244 = vector.broadcast %cst_106 : f32 to vector<10x128xf32>
    %245 = arith.addf %244, %243 : vector<10x128xf32>
    %246 = arith.divf %244, %245 : vector<10x128xf32>
    %247 = vector.extract_strided_slice %223 {offsets = [0, 256], sizes = [10, 128], strides = [1, 1]} : vector<10x384xf32> to vector<10x128xf32>
    %248 = vector.extract_strided_slice %230 {offsets = [0, 256], sizes = [10, 128], strides = [1, 1]} : vector<10x384xf32> to vector<10x128xf32>
    %249 = arith.mulf %238, %248 : vector<10x128xf32>
    %250 = arith.addf %247, %249 : vector<10x128xf32>
    %251 = math.tanh %250 : vector<10x128xf32>
    %cst_107 = arith.constant 1.000000e+00 : f32
    %252 = vector.broadcast %cst_107 : f32 to vector<10x128xf32>
    %253 = arith.subf %252, %246 : vector<10x128xf32>
    %254 = arith.mulf %253, %251 : vector<10x128xf32>
    %255 = arith.mulf %246, %216 : vector<10x128xf32>
    %256 = arith.addf %254, %255 : vector<10x128xf32>
    %c2_108 = arith.constant 2 : index
    %c0_109 = arith.constant 0 : index
    %c0_110 = arith.constant 0 : index
    %257 = vector.load %arg6[%c2_108, %c0_109, %c0_110] : memref<4x10x128xf32, #tpu.memory_space<vmem>>, vector<1x10x128xf32>
    %258 = vector.shape_cast %257 : vector<1x10x128xf32> to vector<10x128xf32>
    %259 = arith.truncf %256 : vector<10x128xf32> to vector<10x128xbf16>
    %c2_111 = arith.constant 2 : index
    %c0_112 = arith.constant 0 : index
    %c0_113 = arith.constant 0 : index
    %260 = vector.load %arg3[%c2_111, %c0_112, %c0_113] : memref<7x128x384xbf16, #tpu.memory_space<vmem>>, vector<1x128x384xbf16>
    %261 = vector.shape_cast %260 : vector<1x128x384xbf16> to vector<128x384xbf16>
    %cst_114 = arith.constant dense<0.000000e+00> : vector<10x384xf32>
    %262 = tpu.matmul %259, %261, %cst_114 {dimension_numbers = #tpu.dot_dimension_numbers<[1], [0], [0], [1], [0, 0, 1, 1], [], []>} : vector<10x128xbf16>, vector<128x384xbf16>, vector<10x384xf32> -> vector<10x384xf32>
    %c12_115 = arith.constant 12 : index
    %c0_116 = arith.constant 0 : index
    %263 = vector.load %arg4[%c12_115, %c0_116] : memref<17x384xf32, #tpu.memory_space<vmem>>, vector<1x384xf32>
    %264 = vector.broadcast %263 : vector<1x384xf32> to vector<10x384xf32>
    %265 = arith.addf %262, %264 : vector<10x384xf32>
    %266 = arith.truncf %258 : vector<10x128xf32> to vector<10x128xbf16>
    %c3_117 = arith.constant 3 : index
    %c0_118 = arith.constant 0 : index
    %c0_119 = arith.constant 0 : index
    %267 = vector.load %arg3[%c3_117, %c0_118, %c0_119] : memref<7x128x384xbf16, #tpu.memory_space<vmem>>, vector<1x128x384xbf16>
    %268 = vector.shape_cast %267 : vector<1x128x384xbf16> to vector<128x384xbf16>
    %cst_120 = arith.constant dense<0.000000e+00> : vector<10x384xf32>
    %269 = tpu.matmul %266, %268, %cst_120 {dimension_numbers = #tpu.dot_dimension_numbers<[1], [0], [0], [1], [0, 0, 1, 1], [], []>} : vector<10x128xbf16>, vector<128x384xbf16>, vector<10x384xf32> -> vector<10x384xf32>
    %c13_121 = arith.constant 13 : index
    %c0_122 = arith.constant 0 : index
    %270 = vector.load %arg4[%c13_121, %c0_122] : memref<17x384xf32, #tpu.memory_space<vmem>>, vector<1x384xf32>
    %271 = vector.broadcast %270 : vector<1x384xf32> to vector<10x384xf32>
    %272 = arith.addf %269, %271 : vector<10x384xf32>
    %273 = vector.extract_strided_slice %265 {offsets = [0, 0], sizes = [10, 128], strides = [1, 1]} : vector<10x384xf32> to vector<10x128xf32>
    %274 = vector.extract_strided_slice %272 {offsets = [0, 0], sizes = [10, 128], strides = [1, 1]} : vector<10x384xf32> to vector<10x128xf32>
    %275 = arith.addf %273, %274 : vector<10x128xf32>
    %276 = arith.negf %275 : vector<10x128xf32>
    %277 = math.exp %276 : vector<10x128xf32>
    %cst_123 = arith.constant 1.000000e+00 : f32
    %278 = vector.broadcast %cst_123 : f32 to vector<10x128xf32>
    %279 = arith.addf %278, %277 : vector<10x128xf32>
    %280 = arith.divf %278, %279 : vector<10x128xf32>
    %281 = vector.extract_strided_slice %265 {offsets = [0, 128], sizes = [10, 128], strides = [1, 1]} : vector<10x384xf32> to vector<10x128xf32>
    %282 = vector.extract_strided_slice %272 {offsets = [0, 128], sizes = [10, 128], strides = [1, 1]} : vector<10x384xf32> to vector<10x128xf32>
    %283 = arith.addf %281, %282 : vector<10x128xf32>
    %284 = arith.negf %283 : vector<10x128xf32>
    %285 = math.exp %284 : vector<10x128xf32>
    %cst_124 = arith.constant 1.000000e+00 : f32
    %286 = vector.broadcast %cst_124 : f32 to vector<10x128xf32>
    %287 = arith.addf %286, %285 : vector<10x128xf32>
    %288 = arith.divf %286, %287 : vector<10x128xf32>
    %289 = vector.extract_strided_slice %265 {offsets = [0, 256], sizes = [10, 128], strides = [1, 1]} : vector<10x384xf32> to vector<10x128xf32>
    %290 = vector.extract_strided_slice %272 {offsets = [0, 256], sizes = [10, 128], strides = [1, 1]} : vector<10x384xf32> to vector<10x128xf32>
    %291 = arith.mulf %280, %290 : vector<10x128xf32>
    %292 = arith.addf %289, %291 : vector<10x128xf32>
    %293 = math.tanh %292 : vector<10x128xf32>
    %cst_125 = arith.constant 1.000000e+00 : f32
    %294 = vector.broadcast %cst_125 : f32 to vector<10x128xf32>
    %295 = arith.subf %294, %288 : vector<10x128xf32>
    %296 = arith.mulf %295, %293 : vector<10x128xf32>
    %297 = arith.mulf %288, %258 : vector<10x128xf32>
    %298 = arith.addf %296, %297 : vector<10x128xf32>
    %c3_126 = arith.constant 3 : index
    %c0_127 = arith.constant 0 : index
    %c0_128 = arith.constant 0 : index
    %299 = vector.load %arg6[%c3_126, %c0_127, %c0_128] : memref<4x10x128xf32, #tpu.memory_space<vmem>>, vector<1x10x128xf32>
    %300 = vector.shape_cast %299 : vector<1x10x128xf32> to vector<10x128xf32>
    %301 = arith.truncf %298 : vector<10x128xf32> to vector<10x128xbf16>
    %c4_129 = arith.constant 4 : index
    %c0_130 = arith.constant 0 : index
    %c0_131 = arith.constant 0 : index
    %302 = vector.load %arg3[%c4_129, %c0_130, %c0_131] : memref<7x128x384xbf16, #tpu.memory_space<vmem>>, vector<1x128x384xbf16>
    %303 = vector.shape_cast %302 : vector<1x128x384xbf16> to vector<128x384xbf16>
    %cst_132 = arith.constant dense<0.000000e+00> : vector<10x384xf32>
    %304 = tpu.matmul %301, %303, %cst_132 {dimension_numbers = #tpu.dot_dimension_numbers<[1], [0], [0], [1], [0, 0, 1, 1], [], []>} : vector<10x128xbf16>, vector<128x384xbf16>, vector<10x384xf32> -> vector<10x384xf32>
    %c14_133 = arith.constant 14 : index
    %c0_134 = arith.constant 0 : index
    %305 = vector.load %arg4[%c14_133, %c0_134] : memref<17x384xf32, #tpu.memory_space<vmem>>, vector<1x384xf32>
    %306 = vector.broadcast %305 : vector<1x384xf32> to vector<10x384xf32>
    %307 = arith.addf %304, %306 : vector<10x384xf32>
    %308 = arith.truncf %300 : vector<10x128xf32> to vector<10x128xbf16>
    %c5_135 = arith.constant 5 : index
    %c0_136 = arith.constant 0 : index
    %c0_137 = arith.constant 0 : index
    %309 = vector.load %arg3[%c5_135, %c0_136, %c0_137] : memref<7x128x384xbf16, #tpu.memory_space<vmem>>, vector<1x128x384xbf16>
    %310 = vector.shape_cast %309 : vector<1x128x384xbf16> to vector<128x384xbf16>
    %cst_138 = arith.constant dense<0.000000e+00> : vector<10x384xf32>
    %311 = tpu.matmul %308, %310, %cst_138 {dimension_numbers = #tpu.dot_dimension_numbers<[1], [0], [0], [1], [0, 0, 1, 1], [], []>} : vector<10x128xbf16>, vector<128x384xbf16>, vector<10x384xf32> -> vector<10x384xf32>
    %c15_139 = arith.constant 15 : index
    %c0_140 = arith.constant 0 : index
    %312 = vector.load %arg4[%c15_139, %c0_140] : memref<17x384xf32, #tpu.memory_space<vmem>>, vector<1x384xf32>
    %313 = vector.broadcast %312 : vector<1x384xf32> to vector<10x384xf32>
    %314 = arith.addf %311, %313 : vector<10x384xf32>
    %315 = vector.extract_strided_slice %307 {offsets = [0, 0], sizes = [10, 128], strides = [1, 1]} : vector<10x384xf32> to vector<10x128xf32>
    %316 = vector.extract_strided_slice %314 {offsets = [0, 0], sizes = [10, 128], strides = [1, 1]} : vector<10x384xf32> to vector<10x128xf32>
    %317 = arith.addf %315, %316 : vector<10x128xf32>
    %318 = arith.negf %317 : vector<10x128xf32>
    %319 = math.exp %318 : vector<10x128xf32>
    %cst_141 = arith.constant 1.000000e+00 : f32
    %320 = vector.broadcast %cst_141 : f32 to vector<10x128xf32>
    %321 = arith.addf %320, %319 : vector<10x128xf32>
    %322 = arith.divf %320, %321 : vector<10x128xf32>
    %323 = vector.extract_strided_slice %307 {offsets = [0, 128], sizes = [10, 128], strides = [1, 1]} : vector<10x384xf32> to vector<10x128xf32>
    %324 = vector.extract_strided_slice %314 {offsets = [0, 128], sizes = [10, 128], strides = [1, 1]} : vector<10x384xf32> to vector<10x128xf32>
    %325 = arith.addf %323, %324 : vector<10x128xf32>
    %326 = arith.negf %325 : vector<10x128xf32>
    %327 = math.exp %326 : vector<10x128xf32>
    %cst_142 = arith.constant 1.000000e+00 : f32
    %328 = vector.broadcast %cst_142 : f32 to vector<10x128xf32>
    %329 = arith.addf %328, %327 : vector<10x128xf32>
    %330 = arith.divf %328, %329 : vector<10x128xf32>
    %331 = vector.extract_strided_slice %307 {offsets = [0, 256], sizes = [10, 128], strides = [1, 1]} : vector<10x384xf32> to vector<10x128xf32>
    %332 = vector.extract_strided_slice %314 {offsets = [0, 256], sizes = [10, 128], strides = [1, 1]} : vector<10x384xf32> to vector<10x128xf32>
    %333 = arith.mulf %322, %332 : vector<10x128xf32>
    %334 = arith.addf %331, %333 : vector<10x128xf32>
    %335 = math.tanh %334 : vector<10x128xf32>
    %cst_143 = arith.constant 1.000000e+00 : f32
    %336 = vector.broadcast %cst_143 : f32 to vector<10x128xf32>
    %337 = arith.subf %336, %330 : vector<10x128xf32>
    %338 = arith.mulf %337, %335 : vector<10x128xf32>
    %339 = arith.mulf %330, %300 : vector<10x128xf32>
    %340 = arith.addf %338, %339 : vector<10x128xf32>
    %c6_144 = arith.constant 6 : index
    %c0_145 = arith.constant 0 : index
    %c0_146 = arith.constant 0 : index
    %341 = vector.load %arg3[%c6_144, %c0_145, %c0_146] : memref<7x128x384xbf16, #tpu.memory_space<vmem>>, vector<1x128x128xbf16>
    %342 = vector.shape_cast %341 : vector<1x128x128xbf16> to vector<128x128xbf16>
    %c16_147 = arith.constant 16 : index
    %c0_148 = arith.constant 0 : index
    %343 = vector.load %arg4[%c16_147, %c0_148] : memref<17x384xf32, #tpu.memory_space<vmem>>, vector<1x128xf32>
    %344 = arith.truncf %340 : vector<10x128xf32> to vector<10x128xbf16>
    %cst_149 = arith.constant dense<0.000000e+00> : vector<10x128xf32>
    %345 = tpu.matmul %344, %342, %cst_149 {dimension_numbers = #tpu.dot_dimension_numbers<[1], [0], [0], [1], [0, 0, 1, 1], [], []>} : vector<10x128xbf16>, vector<128x128xbf16>, vector<10x128xf32> -> vector<10x128xf32>
    %346 = vector.broadcast %343 : vector<1x128xf32> to vector<10x128xf32>
    %347 = arith.addf %345, %346 : vector<10x128xf32>
    %c0_150 = arith.constant 0 : index
    %c0_151 = arith.constant 0 : index
    %348 = vector.load %arg5[%c0_150, %c0_151] : memref<10x128xf32, #tpu.memory_space<vmem>>, vector<10x128xf32>
    tpu.vector_store %arg5[%c0_150, %c0_151], %347 {strides = array<i32>} : memref<10x128xf32, #tpu.memory_space<vmem>>, vector<10x128xf32>,
    return
  }
}

</mosaic_0001>

<llo_original>
// kernel: rganet1_forward.1
$region0: #{rganet1_forward.1}
  #allocation0 [shape = 'u32[]', space=smem, size = 0x4, offset = 0x4, fixed_abs, tag = 'smem constant byte address 0x4 - core index']
  #allocation1 [shape = 'u32[144,128]{1,0:T(1,128)}', space=vmem, size = 0x12000, scoped, tag = 'internal scratch']
  #allocation2 [shape = 'f32[4,10,128]{2,1,0:T(8,128)}', space=vmem, size = 0x8000, scoped, tag = 'scratch operand']
  %s0 = inlined_call_operand.vmem [shape: f32[27], index: 0, kind: input, shape index: {}]
  %s1 = inlined_call_operand.vmem [shape: f32[10,12], index: 1, kind: input, shape index: {}]
  %s2 = inlined_call_operand.vmem [shape: f32[3,10,40], index: 2, kind: input, shape index: {}]
  %s3 = inlined_call_operand.hbm [shape: bf16[7,128,384], index: 3, kind: input, shape index: {}]
  %s4 = inlined_call_operand.vmem [shape: f32[17,384], index: 4, kind: input, shape index: {}]
  %s5 = inlined_call_operand.hbm [shape: f32[10,128], index: 5, kind: output, shape index: {}]
  %s6 = sld [smem:[#allocation0]]
  $region38: #{rganet1_forward.1} parent=0
    _
  %s8 = ssub.s32 1, %s6
  %s9 = scalar_select 0, %s8, %s6
  $region1: #{rganet1_forward.1} parent=0
    #allocation3 [shape = 'u8[512]{0}', space=smem, size = 0x200, scoped, tag = 'input window, operand 0, single buffered']
    #allocation4 [shape = 's32[1]{0}', space=sflag, size = 0x4, scoped, tag = 'scoped memory for rganet1_forward.1']
    #allocation5 [shape = 's32[1]{0}', space=sflag, size = 0x4, scoped, tag = 'scoped memory for rganet1_forward.1']
    #allocation6 [shape = 's32[1]{0}', space=sflag, size = 0x4, scoped, tag = 'scoped memory for rganet1_forward.1']
    #allocation7 [shape = 'u8[688128]{0}', space=vmem, size = 0xa8000, scoped, tag = 'input window, operand 3, single buffered']
    #allocation8 [shape = 'u8[8192]{0}', space=vmem, size = 0x2000, scoped, tag = 'output window, operand 0, single buffered']
    %10 = vsyncpa [#allocation6], 0
    %11 = vsyncpa [#allocation4], 0
    %12 = vsyncpa [#allocation5], 0
    // Predicated region
    $region2: #{rganet1_forward.1} parent=1 // pred_check
      _
    $region3: #{rganet1_forward.1} parent=1 // pred_check_branch
      %14 = sbr.rel (0) target = $region5
    $region4: #{rganet1_forward.1} parent=1 // pred_region
      %s16 = ssub.s32 16, 16
      %17 = vsyncadd [#allocation6], %s16
      %s19 = sshll.u32 %s0, 4
      %s20 = int_to_ptr.vmem [resolvable:$true] %s19
      %22 = dma.vmem_to_smem %s20, 16, [#allocation3], [#allocation6]
    $region5: #{rganet1_forward.1} parent=1 // pred_fallthru
      _
    // Predicated region
    $region6: #{rganet1_forward.1} parent=1 // pred_check
      _
    $region7: #{rganet1_forward.1} parent=1 // pred_check_branch
      %24 = sbr.rel (0) target = $region9
    $region8: #{rganet1_forward.1} parent=1 // pred_region
      _
    $region9: #{rganet1_forward.1} parent=1 // pred_fallthru
      _
    // Predicated region
    $region10: #{rganet1_forward.1} parent=1 // pred_check
      _
    $region11: #{rganet1_forward.1} parent=1 // pred_check_branch
      %26 = sbr.rel (0) target = $region13
    $region12: #{rganet1_forward.1} parent=1 // pred_region
      _
    $region13: #{rganet1_forward.1} parent=1 // pred_fallthru
      _
    // Predicated region
    $region14: #{rganet1_forward.1} parent=1 // pred_check
      _
    $region15: #{rganet1_forward.1} parent=1 // pred_check_branch
      %28 = sbr.rel (0) target = $region17
    $region16: #{rganet1_forward.1} parent=1 // pred_region
      %s30 = ssub.s32 21504, 21504
      %31 = vsyncadd [#allocation4], %s30
      %s32 = sshll.u32 [#allocation7], 4
      %s33 = int_to_ptr.vmem [resolvable:$true] %s32
      %38 = dma.hbm_to_vmem [thread:$0]  %s3, 21504, %s33, [#allocation4], 192, 192, 12
    $region17: #{rganet1_forward.1} parent=1 // pred_fallthru
      _
    // Predicated region
    $region18: #{rganet1_forward.1} parent=1 // pred_check
      _
    $region19: #{rganet1_forward.1} parent=1 // pred_check_branch
      %40 = sbr.rel (0) target = $region21
    $region20: #{rganet1_forward.1} parent=1 // pred_region
      _
    $region21: #{rganet1_forward.1} parent=1 // pred_fallthru
      _
    // Predicated region
    $region22: #{rganet1_forward.1} parent=1 // pred_check
      _
    $region23: #{rganet1_forward.1} parent=1 // pred_check_branch
      %42 = sbr.rel (0) target = $region25
    $region24: #{rganet1_forward.1} parent=1 // pred_region
      %43 = dma.done [#allocation6], 16
    $region25: #{rganet1_forward.1} parent=1 // pred_fallthru
      _
    // Predicated region
    $region26: #{rganet1_forward.1} parent=1 // pred_check
      _
    $region27: #{rganet1_forward.1} parent=1 // pred_check_branch
      %45 = sbr.rel (0) target = $region29
    $region28: #{rganet1_forward.1} parent=1 // pred_region
      %46 = dma.done [#allocation4], 21504
    $region29: #{rganet1_forward.1} parent=1 // pred_fallthru
      _
    %47 = sfence
    %49 = vst [vmem:[#allocation2] sm:$0xff] 0.0
    %50 = vst [vmem:[#allocation2 + $0x8] sm:$0x3] 0.0
    %51 = vst [vmem:[#allocation2 + $0x10] sm:$0xff] 0.0
    %52 = vst [vmem:[#allocation2 + $0x18] sm:$0x3] 0.0
    %53 = vst [vmem:[#allocation2 + $0x20] sm:$0xff] 0.0
    %54 = vst [vmem:[#allocation2 + $0x28] sm:$0x3] 0.0
    %55 = vst [vmem:[#allocation2 + $0x30] sm:$0xff] 0.0
    %56 = vst [vmem:[#allocation2 + $0x38] sm:$0x3] 0.0
    %v57 = vld [vmem:[%s1] sm:$0xff]
    %v58 = vld [vmem:[%s1 + $0x8] sm:$0x3]
    %vm59 = vcmask 97280
    %60 = vst.msk [vmem:[#allocation2] sm:$0xff] %vm59, %v57
    %vm61 = vcmask 91136
    %62 = vst.msk [vmem:[#allocation2 + $0x8] sm:$0x3] %vm61, %v58
    %v63 = vld [vmem:[%s2] sm:$0xff]
    %v64 = vld [vmem:[%s2 + $0x8] sm:$0x3]
    %s65 = scalar_lea.vmem [#allocation2], 16
    %vm66 = vcmask 326656
    %67 = vst.msk [vmem:[%s65] sm:$0xff] %vm66, %v63
    %vm68 = vcmask 320512
    %69 = vst.msk [vmem:[%s65 + $0x8] sm:$0x3] %vm68, %v64
    %s70 = scalar_lea.vmem %s2, 16
    %v71 = vld [vmem:[%s70] sm:$0xff]
    %v72 = vld [vmem:[%s70 + $0x8] sm:$0x3]
    %s73 = scalar_lea.vmem [#allocation2], 32
    %74 = vst.msk [vmem:[%s73] sm:$0xff] %vm66, %v71
    %75 = vst.msk [vmem:[%s73 + $0x8] sm:$0x3] %vm68, %v72
    %s76 = scalar_lea.vmem %s2, 32
    %v77 = vld [vmem:[%s76] sm:$0xff]
    %v78 = vld [vmem:[%s76 + $0x8] sm:$0x3]
    %s79 = scalar_lea.vmem [#allocation2], 48
    %80 = vst.msk [vmem:[%s79] sm:$0xff] %vm66, %v77
    %81 = vst.msk [vmem:[%s79 + $0x8] sm:$0x3] %vm68, %v78
    %v82 = vld [vmem:[#allocation2] sm:$0xff]
    %v83 = vld [vmem:[#allocation2 + $0x8] sm:$0x3]
    %v84 = vld [vmem:[%s4] ss:$0 sm:$0xff]
    %v85 = vmul.f32 %v82, %v84
    %v86 = vmul.f32 %v83, %v84
    %v87 = vld [vmem:[%s4 + $0x8] ss:$0 sm:$0xff]
    %v88 = vadd.f32 %v85, %v87
    %v89 = vadd.f32 %v86, %v87
    %90 = vrot.lane.b32.xlu0 %v88, 1
    %v91 = vpop.permute.xlu0 %90
    %92 = vrot.lane.b32.xlu0 %v89, 1
    %v93 = vpop.permute.xlu0 %92
    %94 = vrot.lane.b32.xlu0 %v88, 127
    %v95 = vpop.permute.xlu0 %94
    %96 = vrot.lane.b32.xlu0 %v89, 127
    %v97 = vpop.permute.xlu0 %96
    %s98 = sld [smem:[#allocation3]]
    %v99 = vstv %s98
    %v100 = vmul.f32 %v99, %v91
    %v101 = vmul.f32 %v99, %v93
    %s102 = sld [smem:[#allocation3 + $0x1]]
    %v103 = vstv %s102
    %v104 = vmul.f32 %v103, %v88
    %v105 = vmul.f32 %v103, %v89
    %v106 = vadd.f32 %v100, %v104
    %v107 = vadd.f32 %v101, %v105
    %s108 = sld [smem:[#allocation3 + $0x2]]
    %v109 = vstv %s108
    %v110 = vmul.f32 %v109, %v95
    %v111 = vmul.f32 %v109, %v97
    %v112 = vadd.f32 %v106, %v110
    %v113 = vadd.f32 %v107, %v111
    %v114 = vld [vmem:[%s4 + $0x1] ss:$0 sm:$0xff]
    %v115 = vmul.f32 %v112, %v114
    %v116 = vmul.f32 %v113, %v114
    %v117 = vld [vmem:[%s4 + $0x9] ss:$0 sm:$0xff]
    %v118 = vadd.f32 %v115, %v117
    %v119 = vadd.f32 %v116, %v117
    %v120 = vmax.f32 %v118, 0.0
    %v121 = vmax.f32 %v119, 0.0
    %122 = vrot.lane.b32.xlu0 %v120, 1
    %v123 = vpop.permute.xlu0 %122
    %124 = vrot.lane.b32.xlu0 %v121, 1
    %v125 = vpop.permute.xlu0 %124
    %126 = vrot.lane.b32.xlu0 %v120, 127
    %v127 = vpop.permute.xlu0 %126
    %128 = vrot.lane.b32.xlu0 %v121, 127
    %v129 = vpop.permute.xlu0 %128
    %s130 = sld [smem:[#allocation3 + $0x3]]
    %v131 = vstv %s130
    %v132 = vmul.f32 %v131, %v123
    %v133 = vmul.f32 %v131, %v125
    %s134 = sld [smem:[#allocation3 + $0x4]]
    %v135 = vstv %s134
    %v136 = vmul.f32 %v135, %v120
    %v137 = vmul.f32 %v135, %v121
    %v138 = vadd.f32 %v132, %v136
    %v139 = vadd.f32 %v133, %v137
    %s140 = sld [smem:[#allocation3 + $0x5]]
    %v141 = vstv %s140
    %v142 = vmul.f32 %v141, %v127
    %v143 = vmul.f32 %v141, %v129
    %v144 = vadd.f32 %v138, %v142
    %v145 = vadd.f32 %v139, %v143
    %v146 = vld [vmem:[%s4 + $0x2] ss:$0 sm:$0xff]
    %v147 = vmul.f32 %v144, %v146
    %v148 = vmul.f32 %v145, %v146
    %v149 = vld [vmem:[%s4 + $0xa] ss:$0 sm:$0xff]
    %v150 = vadd.f32 %v147, %v149
    %v151 = vadd.f32 %v148, %v149
    %152 = vrot.lane.b32.xlu0 %v150, 1
    %v153 = vpop.permute.xlu0 %152
    %154 = vrot.lane.b32.xlu0 %v151, 1
    %v155 = vpop.permute.xlu0 %154
    %156 = vrot.lane.b32.xlu0 %v150, 127
    %v157 = vpop.permute.xlu0 %156
    %158 = vrot.lane.b32.xlu0 %v151, 127
    %v159 = vpop.permute.xlu0 %158
    %s160 = sld [smem:[#allocation3 + $0x6]]
    %v161 = vstv %s160
    %v162 = vmul.f32 %v161, %v153
    %v163 = vmul.f32 %v161, %v155
    %s164 = sld [smem:[#allocation3 + $0x7]]
    %v165 = vstv %s164
    %v166 = vmul.f32 %v165, %v150
    %v167 = vmul.f32 %v165, %v151
    %v168 = vadd.f32 %v162, %v166
    %v169 = vadd.f32 %v163, %v167
    %s170 = sld [smem:[#allocation3 + $0x8]]
    %v171 = vstv %s170
    %v172 = vmul.f32 %v171, %v157
    %v173 = vmul.f32 %v171, %v159
    %v174 = vadd.f32 %v168, %v172
    %v175 = vadd.f32 %v169, %v173
    %v176 = vld [vmem:[%s4 + $0x3] ss:$0 sm:$0xff]
    %v177 = vmul.f32 %v174, %v176
    %v178 = vmul.f32 %v175, %v176
    %v179 = vld [vmem:[%s4 + $0xb] ss:$0 sm:$0xff]
    %v180 = vadd.f32 %v177, %v179
    %v181 = vadd.f32 %v178, %v179
    %v182 = vadd.f32 %v180, %v88
    %v183 = vadd.f32 %v181, %v89
    %v184 = vmax.f32 %v182, 0.0
    %v185 = vmax.f32 %v183, 0.0
    %186 = vrot.lane.b32.xlu0 %v184, 1
    %v187 = vpop.permute.xlu0 %186
    %188 = vrot.lane.b32.xlu0 %v185, 1
    %v189 = vpop.permute.xlu0 %188
    %190 = vrot.lane.b32.xlu0 %v184, 127
    %v191 = vpop.permute.xlu0 %190
    %192 = vrot.lane.b32.xlu0 %v185, 127
    %v193 = vpop.permute.xlu0 %192
    %s194 = sld [smem:[#allocation3 + $0x9]]
    %v195 = vstv %s194
    %v196 = vmul.f32 %v195, %v187
    %v197 = vmul.f32 %v195, %v189
    %s198 = sld [smem:[#allocation3 + $0xa]]
    %v199 = vstv %s198
    %v200 = vmul.f32 %v199, %v184
    %v201 = vmul.f32 %v199, %v185
    %v202 = vadd.f32 %v196, %v200
    %v203 = vadd.f32 %v197, %v201
    %s204 = sld [smem:[#allocation3 + $0xb]]
    %v205 = vstv %s204
    %v206 = vmul.f32 %v205, %v191
    %v207 = vmul.f32 %v205, %v193
    %v208 = vadd.f32 %v202, %v206
    %v209 = vadd.f32 %v203, %v207
    %v210 = vld [vmem:[%s4 + $0x4] ss:$0 sm:$0xff]
    %v211 = vmul.f32 %v208, %v210
    %v212 = vmul.f32 %v209, %v210
    %v213 = vld [vmem:[%s4 + $0xc] ss:$0 sm:$0xff]
    %v214 = vadd.f32 %v211, %v213
    %v215 = vadd.f32 %v212, %v213
    %v216 = vmax.f32 %v214, 0.0
    %v217 = vmax.f32 %v215, 0.0
    %218 = vrot.lane.b32.xlu0 %v216, 1
    %v219 = vpop.permute.xlu0 %218
    %220 = vrot.lane.b32.xlu0 %v217, 1
    %v221 = vpop.permute.xlu0 %220
    %222 = vrot.lane.b32.xlu0 %v216, 127
    %v223 = vpop.permute.xlu0 %222
    %224 = vrot.lane.b32.xlu0 %v217, 127
    %v225 = vpop.permute.xlu0 %224
    %s226 = sld [smem:[#allocation3 + $0xc]]
    %v227 = vstv %s226
    %v228 = vmul.f32 %v227, %v219
    %v229 = vmul.f32 %v227, %v221
    %s230 = sld [smem:[#allocation3 + $0xd]]
    %v231 = vstv %s230
    %v232 = vmul.f32 %v231, %v216
    %v233 = vmul.f32 %v231, %v217
    %v234 = vadd.f32 %v228, %v232
    %v235 = vadd.f32 %v229, %v233
    %s236 = sld [smem:[#allocation3 + $0xe]]
    %v237 = vstv %s236
    %v238 = vmul.f32 %v237, %v223
    %v239 = vmul.f32 %v237, %v225
    %v240 = vadd.f32 %v234, %v238
    %v241 = vadd.f32 %v235, %v239
    %v242 = vld [vmem:[%s4 + $0x5] ss:$0 sm:$0xff]
    %v243 = vmul.f32 %v240, %v242
    %v244 = vmul.f32 %v241, %v242
    %v245 = vld [vmem:[%s4 + $0xd] ss:$0 sm:$0xff]
    %v246 = vadd.f32 %v243, %v245
    %v247 = vadd.f32 %v244, %v245
    %248 = vrot.lane.b32.xlu0 %v246, 1
    %v249 = vpop.permute.xlu0 %248
    %250 = vrot.lane.b32.xlu0 %v247, 1
    %v251 = vpop.permute.xlu0 %250
    %252 = vrot.lane.b32.xlu0 %v246, 127
    %v253 = vpop.permute.xlu0 %252
    %254 = vrot.lane.b32.xlu0 %v247, 127
    %v255 = vpop.permute.xlu0 %254
    %s256 = sld [smem:[#allocation3 + $0xf]]
    %v257 = vstv %s256
    %v258 = vmul.f32 %v257, %v249
    %v259 = vmul.f32 %v257, %v251
    %s260 = sld [smem:[#allocation3 + $0x10]]
    %v261 = vstv %s260
    %v262 = vmul.f32 %v261, %v246
    %v263 = vmul.f32 %v261, %v247
    %v264 = vadd.f32 %v258, %v262
    %v265 = vadd.f32 %v259, %v263
    %s266 = sld [smem:[#allocation3 + $0x11]]
    %v267 = vstv %s266
    %v268 = vmul.f32 %v267, %v253
    %v269 = vmul.f32 %v267, %v255
    %v270 = vadd.f32 %v264, %v268
    %v271 = vadd.f32 %v265, %v269
    %v272 = vld [vmem:[%s4 + $0x6] ss:$0 sm:$0xff]
    %v273 = vmul.f32 %v270, %v272
    %v274 = vmul.f32 %v271, %v272
    %v275 = vld [vmem:[%s4 + $0xe] ss:$0 sm:$0xff]
    %v276 = vadd.f32 %v273, %v275
    %v277 = vadd.f32 %v274, %v275
    %v278 = vadd.f32 %v276, %v184
    %v279 = vadd.f32 %v277, %v185
    %v280 = vmax.f32 %v278, 0.0
    %v281 = vmax.f32 %v279, 0.0
    %282 = vrot.lane.b32.xlu0 %v280, 1
    %v283 = vpop.permute.xlu0 %282
    %284 = vrot.lane.b32.xlu0 %v281, 1
    %v285 = vpop.permute.xlu0 %284
    %286 = vrot.lane.b32.xlu0 %v280, 127
    %v287 = vpop.permute.xlu0 %286
    %288 = vrot.lane.b32.xlu0 %v281, 127
    %v289 = vpop.permute.xlu0 %288
    %s290 = sld [smem:[#allocation3 + $0x12]]
    %v291 = vstv %s290
    %v292 = vmul.f32 %v291, %v283
    %v293 = vmul.f32 %v291, %v285
    %s294 = sld [smem:[#allocation3 + $0x13]]
    %v295 = vstv %s294
    %v296 = vmul.f32 %v295, %v280
    %v297 = vmul.f32 %v295, %v281
    %v298 = vadd.f32 %v292, %v296
    %v299 = vadd.f32 %v293, %v297
    %s300 = sld [smem:[#allocation3 + $0x14]]
    %v301 = vstv %s300
    %v302 = vmul.f32 %v301, %v287
    %v303 = vmul.f32 %v301, %v289
    %v304 = vadd.f32 %v298, %v302
    %v305 = vadd.f32 %v299, %v303
    %v306 = vld [vmem:[%s4 + $0x7] ss:$0 sm:$0xff]
    %v307 = vmul.f32 %v304, %v306
    %v308 = vmul.f32 %v305, %v306
    %v309 = vld [vmem:[%s4 + $0xf] ss:$0 sm:$0xff]
    %v310 = vadd.f32 %v307, %v309
    %v311 = vadd.f32 %v308, %v309
    %v312 = vmax.f32 %v310, 0.0
    %v313 = vmax.f32 %v311, 0.0
    %314 = vrot.lane.b32.xlu0 %v312, 1
    %v315 = vpop.permute.xlu0 %314
    %316 = vrot.lane.b32.xlu0 %v313, 1
    %v317 = vpop.permute.xlu0 %316
    %318 = vrot.lane.b32.xlu0 %v312, 127
    %v319 = vpop.permute.xlu0 %318
    %320 = vrot.lane.b32.xlu0 %v313, 127
    %v321 = vpop.permute.xlu0 %320
    %s322 = sld [smem:[#allocation3 + $0x15]]
    %v323 = vstv %s322
    %v324 = vmul.f32 %v323, %v315
    %v325 = vmul.f32 %v323, %v317
    %s326 = sld [smem:[#allocation3 + $0x16]]
    %v327 = vstv %s326
    %v328 = vmul.f32 %v327, %v312
    %v329 = vmul.f32 %v327, %v313
    %v330 = vadd.f32 %v324, %v328
    %v331 = vadd.f32 %v325, %v329
    %s332 = sld [smem:[#allocation3 + $0x17]]
    %v333 = vstv %s332
    %v334 = vmul.f32 %v333, %v319
    %v335 = vmul.f32 %v333, %v321
    %v336 = vadd.f32 %v330, %v334
    %v337 = vadd.f32 %v331, %v335
    %v338 = vld [vmem:[%s4 + $0x18] ss:$0 sm:$0xff]
    %v339 = vmul.f32 %v336, %v338
    %v340 = vmul.f32 %v337, %v338
    %v341 = vld [vmem:[%s4 + $0x20] ss:$0 sm:$0xff]
    %v342 = vadd.f32 %v339, %v341
    %v343 = vadd.f32 %v340, %v341
    %344 = vrot.lane.b32.xlu0 %v342, 1
    %v345 = vpop.permute.xlu0 %344
    %346 = vrot.lane.b32.xlu0 %v343, 1
    %v347 = vpop.permute.xlu0 %346
    %348 = vrot.lane.b32.xlu0 %v342, 127
    %v349 = vpop.permute.xlu0 %348
    %350 = vrot.lane.b32.xlu0 %v343, 127
    %v351 = vpop.permute.xlu0 %350
    %s352 = sld [smem:[#allocation3 + $0x18]]
    %v353 = vstv %s352
    %v354 = vmul.f32 %v353, %v345
    %v355 = vmul.f32 %v353, %v347
    %s356 = sld [smem:[#allocation3 + $0x19]]
    %v357 = vstv %s356
    %v358 = vmul.f32 %v357, %v342
    %v359 = vmul.f32 %v357, %v343
    %v360 = vadd.f32 %v354, %v358
    %v361 = vadd.f32 %v355, %v359
    %s362 = sld [smem:[#allocation3 + $0x1a]]
    %v363 = vstv %s362
    %v364 = vmul.f32 %v363, %v349
    %v365 = vmul.f32 %v363, %v351
    %v366 = vadd.f32 %v360, %v364
    %v367 = vadd.f32 %v361, %v365
    %v368 = vld [vmem:[%s4 + $0x19] ss:$0 sm:$0xff]
    %v369 = vmul.f32 %v366, %v368
    %v370 = vmul.f32 %v367, %v368
    %v371 = vld [vmem:[%s4 + $0x21] ss:$0 sm:$0xff]
    %v372 = vadd.f32 %v369, %v371
    %v373 = vadd.f32 %v370, %v371
    %v374 = vadd.f32 %v372, %v280
    %v375 = vadd.f32 %v373, %v281
    %v376 = vmax.f32 %v374, 0.0
    %v377 = vmax.f32 %v375, 0.0
    %v378 = vld [vmem:[%s65] sm:$0xff]
    %v379 = vld [vmem:[%s65 + $0x8] sm:$0x3]
    %v380 = vpack.c.bf16 %v377, %v376
    %v381 = vld [vmem:[#allocation7] sm:$0xff]
    %v382 = vld [vmem:[#allocation7 + $0x8] sm:$0xf]
    %v383 = vld [vmem:[#allocation7 + $0xc] sm:$0xff]
    %v384 = vld [vmem:[#allocation7 + $0x14] sm:$0xf]
    %v385 = vld [vmem:[#allocation7 + $0x18] sm:$0xff]
    %v386 = vld [vmem:[#allocation7 + $0x20] sm:$0xf]
    %v387 = vld [vmem:[#allocation7 + $0x24] sm:$0xff]
    %v388 = vld [vmem:[#allocation7 + $0x2c] sm:$0xf]
    %v389 = vld [vmem:[#allocation7 + $0x30] sm:$0xff]
    %v390 = vld [vmem:[#allocation7 + $0x38] sm:$0xf]
    %v391 = vld [vmem:[#allocation7 + $0x3c] sm:$0xff]
    %v392 = vld [vmem:[#allocation7 + $0x44] sm:$0xf]
    %v393 = vld [vmem:[#allocation7 + $0x48] sm:$0xff]
    %v394 = vld [vmem:[#allocation7 + $0x50] sm:$0xf]
    %v395 = vld [vmem:[#allocation7 + $0x54] sm:$0xff]
    %v396 = vld [vmem:[#allocation7 + $0x5c] sm:$0xf]
    %v397 = vld [vmem:[#allocation7 + $0x60] sm:$0xff]
    %v398 = vld [vmem:[#allocation7 + $0x68] sm:$0xf]
    %v399 = vld [vmem:[#allocation7 + $0x6c] sm:$0xff]
    %v400 = vld [vmem:[#allocation7 + $0x74] sm:$0xf]
    %v401 = vld [vmem:[#allocation7 + $0x78] sm:$0xff]
    %v402 = vld [vmem:[#allocation7 + $0x80] sm:$0xf]
    %v403 = vld [vmem:[#allocation7 + $0x84] sm:$0xff]
    %v404 = vld [vmem:[#allocation7 + $0x8c] sm:$0xf]
    %v405 = vld [vmem:[#allocation7 + $0x90] sm:$0xff]
    %v406 = vld [vmem:[#allocation7 + $0x98] sm:$0xf]
    %v407 = vld [vmem:[#allocation7 + $0x9c] sm:$0xff]
    %v408 = vld [vmem:[#allocation7 + $0xa4] sm:$0xf]
    %v409 = vld [vmem:[#allocation7 + $0xa8] sm:$0xff]
    %v410 = vld [vmem:[#allocation7 + $0xb0] sm:$0xf]
    %v411 = vld [vmem:[#allocation7 + $0xb4] sm:$0xff]
    %v412 = vld [vmem:[#allocation7 + $0xbc] sm:$0xf]
    %s413 = scalar_lea.vmem %s4, 26
    %v414 = vld [vmem:[%s413] ss:$8 sm:$0x7]
    %v416 = vlaneseq
    %v417 = vshrl.u32 %v416, 7
    %v418 = vsub.s32 0, %v417
    %v419 = vrot.slane %v414, %v418
    %v420 = vlaneseq
    %v421 = vshrl.u32 %v420, 7
    %v422 = vsub.s32 1, %v421
    %v423 = vrot.slane %v414, %v422
    %v424 = vlaneseq
    %v425 = vshrl.u32 %v424, 7
    %v426 = vsub.s32 2, %v425
    %v427 = vrot.slane %v414, %v426
    %v463 = vunpack.c.l.b16 %v381
    %v464 = vunpack.c.h.b16 %v381
    %v465 = vunpack.c.l.b16 %v382
    %v466 = vunpack.c.l.b16 %v383
    %v467 = vunpack.c.h.b16 %v383
    %v468 = vunpack.c.l.b16 %v384
    %v469 = vunpack.c.l.b16 %v385
    %v470 = vunpack.c.h.b16 %v385
    %v471 = vunpack.c.l.b16 %v386
    %v472 = vunpack.c.l.b16 %v387
    %v473 = vunpack.c.h.b16 %v387
    %v474 = vunpack.c.l.b16 %v388
    %v475 = vunpack.c.l.b16 %v389
    %v476 = vunpack.c.h.b16 %v389
    %v477 = vunpack.c.l.b16 %v390
    %v478 = vunpack.c.l.b16 %v391
    %v479 = vunpack.c.h.b16 %v391
    %v480 = vunpack.c.l.b16 %v392
    %v481 = vunpack.c.l.b16 %v393
    %v482 = vunpack.c.h.b16 %v393
    %v483 = vunpack.c.l.b16 %v394
    %v484 = vunpack.c.l.b16 %v395
    %v485 = vunpack.c.h.b16 %v395
    %v486 = vunpack.c.l.b16 %v396
    %v487 = vunpack.c.l.b16 %v397
    %v488 = vunpack.c.h.b16 %v397
    %v489 = vunpack.c.l.b16 %v398
    %v490 = vunpack.c.l.b16 %v399
    %v491 = vunpack.c.h.b16 %v399
    %v492 = vunpack.c.l.b16 %v400
    %v493 = vunpack.c.l.b16 %v401
    %v494 = vunpack.c.h.b16 %v401
    %v495 = vunpack.c.l.b16 %v402
    %v496 = vunpack.c.l.b16 %v403
    %v497 = vunpack.c.h.b16 %v403
    %v498 = vunpack.c.l.b16 %v404
    %v499 = vunpack.c.l.b16 %v405
    %v500 = vunpack.c.h.b16 %v405
    %v501 = vunpack.c.l.b16 %v406
    %v502 = vunpack.c.l.b16 %v407
    %v503 = vunpack.c.h.b16 %v407
    %v504 = vunpack.c.l.b16 %v408
    %v505 = vunpack.c.l.b16 %v409
    %v506 = vunpack.c.h.b16 %v409
    %v507 = vunpack.c.l.b16 %v410
    %v508 = vunpack.c.l.b16 %v411
    %v509 = vunpack.c.h.b16 %v411
    %v510 = vunpack.c.l.b16 %v412
    %v511 = vpack.c.b16 %v466, %v463
    %v512 = vpack.c.b16 %v467, %v464
    %v513 = vpack.c.b16 %v468, %v465
    %v514 = vpack.c.b16 %v472, %v469
    %v515 = vpack.c.b16 %v473, %v470
    %v516 = vpack.c.b16 %v474, %v471
    %v517 = vpack.c.b16 %v478, %v475
    %v518 = vpack.c.b16 %v479, %v476
    %v519 = vpack.c.b16 %v480, %v477
    %v520 = vpack.c.b16 %v484, %v481
    %v521 = vpack.c.b16 %v485, %v482
    %v522 = vpack.c.b16 %v486, %v483
    %v523 = vpack.c.b16 %v490, %v487
    %v524 = vpack.c.b16 %v491, %v488
    %v525 = vpack.c.b16 %v492, %v489
    %v526 = vpack.c.b16 %v496, %v493
    %v527 = vpack.c.b16 %v497, %v494
    %v528 = vpack.c.b16 %v498, %v495
    %v529 = vpack.c.b16 %v502, %v499
    %v530 = vpack.c.b16 %v503, %v500
    %v531 = vpack.c.b16 %v504, %v501
    %v532 = vpack.c.b16 %v508, %v505
    %v533 = vpack.c.b16 %v509, %v506
    %v534 = vpack.c.b16 %v510, %v507
    %559 = vmatprep.subr.bf16.mxu0 %v512
    %560 = vmatpush1.bf16.msra.mxu0 %v511
    %561 = vmatprep.subr.bf16.mxu0 %v515
    %562 = vmatpush1.bf16.msra.mxu0 %v514
    %563 = vmatprep.subr.bf16.mxu0 %v518
    %564 = vmatpush1.bf16.msra.mxu0 %v517
    %565 = vmatprep.subr.bf16.mxu0 %v521
    %566 = vmatpush1.bf16.msra.mxu0 %v520
    %567 = vmatprep.subr.bf16.mxu0 %v524
    %568 = vmatpush1.bf16.msra.mxu0 %v523
    %569 = vmatprep.subr.bf16.mxu0 %v527
    %570 = vmatpush1.bf16.msra.mxu0 %v526
    %571 = vmatprep.subr.bf16.mxu0 %v530
    %572 = vmatpush1.bf16.msra.mxu0 %v529
    %573 = vmatprep.subr.bf16.mxu0 %v533
    %574 = vmatpush1.bf16.msra.mxu0 %v532
    %575 = vmatprep.subr.bf16.mxu0 0
    %576 = vmatpush1.bf16.msra.mxu0 0
    %577 = vmatprep.subr.bf16.mxu0 0
    %578 = vmatpush1.bf16.msra.mxu0 0
    %579 = vmatprep.subr.bf16.mxu0 0
    %580 = vmatpush1.bf16.msra.mxu0 0
    %581 = vmatprep.subr.bf16.mxu0 0
    %582 = vmatpush1.bf16.msra.mxu0 0
    %583 = vmatprep.subr.bf16.mxu0 0
    %584 = vmatpush1.bf16.msra.mxu0 0
    %585 = vmatprep.subr.bf16.mxu0 0
    %586 = vmatpush1.bf16.msra.mxu0 0
    %587 = vmatprep.subr.bf16.mxu0 0
    %588 = vmatpush1.bf16.msra.mxu0 0
    %589 = vmatprep.subr.bf16.mxu0 0
    %590 = vmatpush1.bf16.msra.mxu0 0
    %591 = vmatprep.mubr.bf16.mxu0 0
    %592 = vmatmul.mubr.bf16.gmra.mrb[0].mxu0 %v380
    %v593 = vpop.f32.mrb[0].mxu0
    %v594 = vadd.f32 %v419, %v593
    %v595 = vpop.f32.mrb[0].mxu0
    %v596 = vadd.f32 %v423, %v595
    %v597 = vpop.f32.mrb[0].mxu0
    %v598 = vadd.f32 %v419, %v597
    %v599 = vpop.f32.mrb[0].mxu0
    %v600 = vadd.f32 %v423, %v599
    %601 = vdwg.mxu0
    %602 = vmatprep.subr.bf16.mxu0 0
    %603 = vmatpush1.bf16.msra.mxu0 %v513
    %604 = vmatprep.subr.bf16.mxu0 0
    %605 = vmatpush1.bf16.msra.mxu0 %v516
    %606 = vmatprep.subr.bf16.mxu0 0
    %607 = vmatpush1.bf16.msra.mxu0 %v519
    %608 = vmatprep.subr.bf16.mxu0 0
    %609 = vmatpush1.bf16.msra.mxu0 %v522
    %610 = vmatprep.subr.bf16.mxu0 0
    %611 = vmatpush1.bf16.msra.mxu0 %v525
    %612 = vmatprep.subr.bf16.mxu0 0
    %613 = vmatpush1.bf16.msra.mxu0 %v528
    %614 = vmatprep.subr.bf16.mxu0 0
    %615 = vmatpush1.bf16.msra.mxu0 %v531
    %616 = vmatprep.subr.bf16.mxu0 0
    %617 = vmatpush1.bf16.msra.mxu0 %v534
    %618 = vmatprep.subr.bf16.mxu0 0
    %619 = vmatpush1.bf16.msra.mxu0 0
    %620 = vmatprep.subr.bf16.mxu0 0
    %621 = vmatpush1.bf16.msra.mxu0 0
    %622 = vmatprep.subr.bf16.mxu0 0
    %623 = vmatpush1.bf16.msra.mxu0 0
    %624 = vmatprep.subr.bf16.mxu0 0
    %625 = vmatpush1.bf16.msra.mxu0 0
    %626 = vmatprep.subr.bf16.mxu0 0
    %627 = vmatpush1.bf16.msra.mxu0 0
    %628 = vmatprep.subr.bf16.mxu0 0
    %629 = vmatpush1.bf16.msra.mxu0 0
    %630 = vmatprep.subr.bf16.mxu0 0
    %631 = vmatpush1.bf16.msra.mxu0 0
    %632 = vmatprep.subr.bf16.mxu0 0
    %633 = vmatpush1.bf16.msra.mxu0 0
    %634 = vmatprep.mubr.bf16.mxu0 0
    %635 = vmatmul.mubr.bf16.gmra.mrb[0].mxu0 %v380
    %v636 = vpop.f32.mrb[0].mxu0
    %v637 = vadd.f32 %v427, %v636
    %v638 = vpop.f32.mrb[0].mxu0
    %v639 = vpop.f32.mrb[0].mxu0
    %v640 = vadd.f32 %v427, %v639
    %v641 = vpop.f32.mrb[0].mxu0
    %642 = vdwg.mxu0
    %v643 = vpack.c.bf16 %v379, %v378
    %s644 = scalar_lea.vmem [#allocation7], 192
    %v645 = vld [vmem:[%s644] sm:$0xff]
    %v646 = vld [vmem:[%s644 + $0x8] sm:$0xf]
    %v647 = vld [vmem:[%s644 + $0xc] sm:$0xff]
    %v648 = vld [vmem:[%s644 + $0x14] sm:$0xf]
    %v649 = vld [vmem:[%s644 + $0x18] sm:$0xff]
    %v650 = vld [vmem:[%s644 + $0x20] sm:$0xf]
    %v651 = vld [vmem:[%s644 + $0x24] sm:$0xff]
    %v652 = vld [vmem:[%s644 + $0x2c] sm:$0xf]
    %v653 = vld [vmem:[%s644 + $0x30] sm:$0xff]
    %v654 = vld [vmem:[%s644 + $0x38] sm:$0xf]
    %v655 = vld [vmem:[%s644 + $0x3c] sm:$0xff]
    %v656 = vld [vmem:[%s644 + $0x44] sm:$0xf]
    %v657 = vld [vmem:[%s644 + $0x48] sm:$0xff]
    %v658 = vld [vmem:[%s644 + $0x50] sm:$0xf]
    %v659 = vld [vmem:[%s644 + $0x54] sm:$0xff]
    %v660 = vld [vmem:[%s644 + $0x5c] sm:$0xf]
    %v661 = vld [vmem:[%s644 + $0x60] sm:$0xff]
    %v662 = vld [vmem:[%s644 + $0x68] sm:$0xf]
    %v663 = vld [vmem:[%s644 + $0x6c] sm:$0xff]
    %v664 = vld [vmem:[%s644 + $0x74] sm:$0xf]
    %v665 = vld [vmem:[%s644 + $0x78] sm:$0xff]
    %v666 = vld [vmem:[%s644 + $0x80] sm:$0xf]
    %v667 = vld [vmem:[%s644 + $0x84] sm:$0xff]
    %v668 = vld [vmem:[%s644 + $0x8c] sm:$0xf]
    %v669 = vld [vmem:[%s644 + $0x90] sm:$0xff]
    %v670 = vld [vmem:[%s644 + $0x98] sm:$0xf]
    %v671 = vld [vmem:[%s644 + $0x9c] sm:$0xff]
    %v672 = vld [vmem:[%s644 + $0xa4] sm:$0xf]
    %v673 = vld [vmem:[%s644 + $0xa8] sm:$0xff]
    %v674 = vld [vmem:[%s644 + $0xb0] sm:$0xf]
    %v675 = vld [vmem:[%s644 + $0xb4] sm:$0xff]
    %v676 = vld [vmem:[%s644 + $0xbc] sm:$0xf]
    %s677 = scalar_lea.vmem %s4, 27
    %v678 = vld [vmem:[%s677] ss:$8 sm:$0x7]
    %v680 = vlaneseq
    %v681 = vshrl.u32 %v680, 7
    %v682 = vsub.s32 0, %v681
    %v683 = vrot.slane %v678, %v682
    %v684 = vlaneseq
    %v685 = vshrl.u32 %v684, 7
    %v686 = vsub.s32 1, %v685
    %v687 = vrot.slane %v678, %v686
    %v688 = vlaneseq
    %v689 = vshrl.u32 %v688, 7
    %v690 = vsub.s32 2, %v689
    %v691 = vrot.slane %v678, %v690
    %v727 = vunpack.c.l.b16 %v645
    %v728 = vunpack.c.h.b16 %v645
    %v729 = vunpack.c.l.b16 %v646
    %v730 = vunpack.c.l.b16 %v647
    %v731 = vunpack.c.h.b16 %v647
    %v732 = vunpack.c.l.b16 %v648
    %v733 = vunpack.c.l.b16 %v649
    %v734 = vunpack.c.h.b16 %v649
    %v735 = vunpack.c.l.b16 %v650
    %v736 = vunpack.c.l.b16 %v651
    %v737 = vunpack.c.h.b16 %v651
    %v738 = vunpack.c.l.b16 %v652
    %v739 = vunpack.c.l.b16 %v653
    %v740 = vunpack.c.h.b16 %v653
    %v741 = vunpack.c.l.b16 %v654
    %v742 = vunpack.c.l.b16 %v655
    %v743 = vunpack.c.h.b16 %v655
    %v744 = vunpack.c.l.b16 %v656
    %v745 = vunpack.c.l.b16 %v657
    %v746 = vunpack.c.h.b16 %v657
    %v747 = vunpack.c.l.b16 %v658
    %v748 = vunpack.c.l.b16 %v659
    %v749 = vunpack.c.h.b16 %v659
    %v750 = vunpack.c.l.b16 %v660
    %v751 = vunpack.c.l.b16 %v661
    %v752 = vunpack.c.h.b16 %v661
    %v753 = vunpack.c.l.b16 %v662
    %v754 = vunpack.c.l.b16 %v663
    %v755 = vunpack.c.h.b16 %v663
    %v756 = vunpack.c.l.b16 %v664
    %v757 = vunpack.c.l.b16 %v665
    %v758 = vunpack.c.h.b16 %v665
    %v759 = vunpack.c.l.b16 %v666
    %v760 = vunpack.c.l.b16 %v667
    %v761 = vunpack.c.h.b16 %v667
    %v762 = vunpack.c.l.b16 %v668
    %v763 = vunpack.c.l.b16 %v669
    %v764 = vunpack.c.h.b16 %v669
    %v765 = vunpack.c.l.b16 %v670
    %v766 = vunpack.c.l.b16 %v671
    %v767 = vunpack.c.h.b16 %v671
    %v768 = vunpack.c.l.b16 %v672
    %v769 = vunpack.c.l.b16 %v673
    %v770 = vunpack.c.h.b16 %v673
    %v771 = vunpack.c.l.b16 %v674
    %v772 = vunpack.c.l.b16 %v675
    %v773 = vunpack.c.h.b16 %v675
    %v774 = vunpack.c.l.b16 %v676
    %v775 = vpack.c.b16 %v730, %v727
    %v776 = vpack.c.b16 %v731, %v728
    %v777 = vpack.c.b16 %v732, %v729
    %v778 = vpack.c.b16 %v736, %v733
    %v779 = vpack.c.b16 %v737, %v734
    %v780 = vpack.c.b16 %v738, %v735
    %v781 = vpack.c.b16 %v742, %v739
    %v782 = vpack.c.b16 %v743, %v740
    %v783 = vpack.c.b16 %v744, %v741
    %v784 = vpack.c.b16 %v748, %v745
    %v785 = vpack.c.b16 %v749, %v746
    %v786 = vpack.c.b16 %v750, %v747
    %v787 = vpack.c.b16 %v754, %v751
    %v788 = vpack.c.b16 %v755, %v752
    %v789 = vpack.c.b16 %v756, %v753
    %v790 = vpack.c.b16 %v760, %v757
    %v791 = vpack.c.b16 %v761, %v758
    %v792 = vpack.c.b16 %v762, %v759
    %v793 = vpack.c.b16 %v766, %v763
    %v794 = vpack.c.b16 %v767, %v764
    %v795 = vpack.c.b16 %v768, %v765
    %v796 = vpack.c.b16 %v772, %v769
    %v797 = vpack.c.b16 %v773, %v770
    %v798 = vpack.c.b16 %v774, %v771
    %823 = vmatprep.subr.bf16.mxu0 %v776
    %824 = vmatpush1.bf16.msra.mxu0 %v775
    %825 = vmatprep.subr.bf16.mxu0 %v779
    %826 = vmatpush1.bf16.msra.mxu0 %v778
    %827 = vmatprep.subr.bf16.mxu0 %v782
    %828 = vmatpush1.bf16.msra.mxu0 %v781
    %829 = vmatprep.subr.bf16.mxu0 %v785
    %830 = vmatpush1.bf16.msra.mxu0 %v784
    %831 = vmatprep.subr.bf16.mxu0 %v788
    %832 = vmatpush1.bf16.msra.mxu0 %v787
    %833 = vmatprep.subr.bf16.mxu0 %v791
    %834 = vmatpush1.bf16.msra.mxu0 %v790
    %835 = vmatprep.subr.bf16.mxu0 %v794
    %836 = vmatpush1.bf16.msra.mxu0 %v793
    %837 = vmatprep.subr.bf16.mxu0 %v797
    %838 = vmatpush1.bf16.msra.mxu0 %v796
    %839 = vmatprep.subr.bf16.mxu0 0
    %840 = vmatpush1.bf16.msra.mxu0 0
    %841 = vmatprep.subr.bf16.mxu0 0
    %842 = vmatpush1.bf16.msra.mxu0 0
    %843 = vmatprep.subr.bf16.mxu0 0
    %844 = vmatpush1.bf16.msra.mxu0 0
    %845 = vmatprep.subr.bf16.mxu0 0
    %846 = vmatpush1.bf16.msra.mxu0 0
    %847 = vmatprep.subr.bf16.mxu0 0
    %848 = vmatpush1.bf16.msra.mxu0 0
    %849 = vmatprep.subr.bf16.mxu0 0
    %850 = vmatpush1.bf16.msra.mxu0 0
    %851 = vmatprep.subr.bf16.mxu0 0
    %852 = vmatpush1.bf16.msra.mxu0 0
    %853 = vmatprep.subr.bf16.mxu0 0
    %854 = vmatpush1.bf16.msra.mxu0 0
    %855 = vmatprep.mubr.bf16.mxu0 0
    %856 = vmatmul.mubr.bf16.gmra.mrb[0].mxu0 %v643
    %v857 = vpop.f32.mrb[0].mxu0
    %v858 = vadd.f32 %v683, %v857
    %v859 = vpop.f32.mrb[0].mxu0
    %v860 = vadd.f32 %v687, %v859
    %v861 = vpop.f32.mrb[0].mxu0
    %v862 = vadd.f32 %v683, %v861
    %v863 = vpop.f32.mrb[0].mxu0
    %v864 = vadd.f32 %v687, %v863
    %865 = vdwg.mxu0
    %866 = vmatprep.subr.bf16.mxu0 0
    %867 = vmatpush1.bf16.msra.mxu0 %v777
    %868 = vmatprep.subr.bf16.mxu0 0
    %869 = vmatpush1.bf16.msra.mxu0 %v780
    %870 = vmatprep.subr.bf16.mxu0 0
    %871 = vmatpush1.bf16.msra.mxu0 %v783
    %872 = vmatprep.subr.bf16.mxu0 0
    %873 = vmatpush1.bf16.msra.mxu0 %v786
    %874 = vmatprep.subr.bf16.mxu0 0
    %875 = vmatpush1.bf16.msra.mxu0 %v789
    %876 = vmatprep.subr.bf16.mxu0 0
    %877 = vmatpush1.bf16.msra.mxu0 %v792
    %878 = vmatprep.subr.bf16.mxu0 0
    %879 = vmatpush1.bf16.msra.mxu0 %v795
    %880 = vmatprep.subr.bf16.mxu0 0
    %881 = vmatpush1.bf16.msra.mxu0 %v798
    %882 = vmatprep.subr.bf16.mxu0 0
    %883 = vmatpush1.bf16.msra.mxu0 0
    %884 = vmatprep.subr.bf16.mxu0 0
    %885 = vmatpush1.bf16.msra.mxu0 0
    %886 = vmatprep.subr.bf16.mxu0 0
    %887 = vmatpush1.bf16.msra.mxu0 0
    %888 = vmatprep.subr.bf16.mxu0 0
    %889 = vmatpush1.bf16.msra.mxu0 0
    %890 = vmatprep.subr.bf16.mxu0 0
    %891 = vmatpush1.bf16.msra.mxu0 0
    %892 = vmatprep.subr.bf16.mxu0 0
    %893 = vmatpush1.bf16.msra.mxu0 0
    %894 = vmatprep.subr.bf16.mxu0 0
    %895 = vmatpush1.bf16.msra.mxu0 0
    %896 = vmatprep.subr.bf16.mxu0 0
    %897 = vmatpush1.bf16.msra.mxu0 0
    %898 = vmatprep.mubr.bf16.mxu0 0
    %899 = vmatmul.mubr.bf16.gmra.mrb[0].mxu0 %v643
    %v900 = vpop.f32.mrb[0].mxu0
    %v901 = vadd.f32 %v691, %v900
    %v902 = vpop.f32.mrb[0].mxu0
    %v903 = vpop.f32.mrb[0].mxu0
    %v904 = vadd.f32 %v691, %v903
    %v905 = vpop.f32.mrb[0].mxu0
    %906 = vdwg.mxu0
    %v907 = vadd.f32 %v594, %v858
    %v908 = vadd.f32 %v598, %v862
    %v909 = vxor.u32 %v907, 2147483648
    %v910 = vxor.u32 %v908, 2147483648
    %v911 = vmul.f32 %v909, 1.442695
    %v912 = vpow.pop %v911
    %v913 = vmul.f32 %v910, 1.442695
    %v914 = vpow.pop %v913
    %v915 = vadd.f32 %v912, 1.0
    %v916 = vadd.f32 %v914, 1.0
    %v917 = vrcp.pop %v915
    %v918 = vmul.f32 1.0, %v917
    %v919 = vrcp.pop %v916
    %v920 = vmul.f32 1.0, %v919
    %v921 = vadd.f32 %v596, %v860
    %v922 = vadd.f32 %v600, %v864
    %v923 = vxor.u32 %v921, 2147483648
    %v924 = vxor.u32 %v922, 2147483648
    %v925 = vmul.f32 %v923, 1.442695
    %v926 = vpow.pop %v925
    %v927 = vmul.f32 %v924, 1.442695
    %v928 = vpow.pop %v927
    %v929 = vadd.f32 %v926, 1.0
    %v930 = vadd.f32 %v928, 1.0
    %v931 = vrcp.pop %v929
    %v932 = vmul.f32 1.0, %v931
    %v933 = vrcp.pop %v930
    %v934 = vmul.f32 1.0, %v933
    %v935 = vmul.f32 %v918, %v901
    %v936 = vmul.f32 %v920, %v904
    %v937 = vadd.f32 %v637, %v935
    %v938 = vadd.f32 %v640, %v936
    %v939 = vtanh.pop %v937
    %v940 = vtanh.pop %v938
    %v941 = vsub.f32 1.0, %v932
    %v942 = vsub.f32 1.0, %v934
    %v943 = vmul.f32 %v941, %v939
    %v944 = vmul.f32 %v942, %v940
    %v945 = vmul.f32 %v932, %v378
    %v946 = vmul.f32 %v934, %v379
    %v947 = vadd.f32 %v943, %v945
    %v948 = vadd.f32 %v944, %v946
    %v949 = vld [vmem:[%s73] sm:$0xff]
    %v950 = vld [vmem:[%s73 + $0x8] sm:$0x3]
    %v951 = vpack.c.bf16 %v948, %v947
    %s952 = scalar_lea.vmem [#allocation7], 384
    %v953 = vld [vmem:[%s952] sm:$0xff]
    %v954 = vld [vmem:[%s952 + $0x8] sm:$0xf]
    %v955 = vld [vmem:[%s952 + $0xc] sm:$0xff]
    %v956 = vld [vmem:[%s952 + $0x14] sm:$0xf]
    %v957 = vld [vmem:[%s952 + $0x18] sm:$0xff]
    %v958 = vld [vmem:[%s952 + $0x20] sm:$0xf]
    %v959 = vld [vmem:[%s952 + $0x24] sm:$0xff]
    %v960 = vld [vmem:[%s952 + $0x2c] sm:$0xf]
    %v961 = vld [vmem:[%s952 + $0x30] sm:$0xff]
    %v962 = vld [vmem:[%s952 + $0x38] sm:$0xf]
    %v963 = vld [vmem:[%s952 + $0x3c] sm:$0xff]
    %v964 = vld [vmem:[%s952 + $0x44] sm:$0xf]
    %v965 = vld [vmem:[%s952 + $0x48] sm:$0xff]
    %v966 = vld [vmem:[%s952 + $0x50] sm:$0xf]
    %v967 = vld [vmem:[%s952 + $0x54] sm:$0xff]
    %v968 = vld [vmem:[%s952 + $0x5c] sm:$0xf]
    %v969 = vld [vmem:[%s952 + $0x60] sm:$0xff]
    %v970 = vld [vmem:[%s952 + $0x68] sm:$0xf]
    %v971 = vld [vmem:[%s952 + $0x6c] sm:$0xff]
    %v972 = vld [vmem:[%s952 + $0x74] sm:$0xf]
    %v973 = vld [vmem:[%s952 + $0x78] sm:$0xff]
    %v974 = vld [vmem:[%s952 + $0x80] sm:$0xf]
    %v975 = vld [vmem:[%s952 + $0x84] sm:$0xff]
    %v976 = vld [vmem:[%s952 + $0x8c] sm:$0xf]
    %v977 = vld [vmem:[%s952 + $0x90] sm:$0xff]
    %v978 = vld [vmem:[%s952 + $0x98] sm:$0xf]
    %v979 = vld [vmem:[%s952 + $0x9c] sm:$0xff]
    %v980 = vld [vmem:[%s952 + $0xa4] sm:$0xf]
    %v981 = vld [vmem:[%s952 + $0xa8] sm:$0xff]
    %v982 = vld [vmem:[%s952 + $0xb0] sm:$0xf]
    %v983 = vld [vmem:[%s952 + $0xb4] sm:$0xff]
    %v984 = vld [vmem:[%s952 + $0xbc] sm:$0xf]
    %s985 = scalar_lea.vmem %s4, 28
    %v986 = vld [vmem:[%s985] ss:$8 sm:$0x7]
    %v988 = vlaneseq
    %v989 = vshrl.u32 %v988, 7
    %v990 = vsub.s32 0, %v989
    %v991 = vrot.slane %v986, %v990
    %v992 = vlaneseq
    %v993 = vshrl.u32 %v992, 7
    %v994 = vsub.s32 1, %v993
    %v995 = vrot.slane %v986, %v994
    %v996 = vlaneseq
    %v997 = vshrl.u32 %v996, 7
    %v998 = vsub.s32 2, %v997
    %v999 = vrot.slane %v986, %v998
    %v1035 = vunpack.c.l.b16 %v953
    %v1036 = vunpack.c.h.b16 %v953
    %v1037 = vunpack.c.l.b16 %v954
    %v1038 = vunpack.c.l.b16 %v955
    %v1039 = vunpack.c.h.b16 %v955
    %v1040 = vunpack.c.l.b16 %v956
    %v1041 = vunpack.c.l.b16 %v957
    %v1042 = vunpack.c.h.b16 %v957
    %v1043 = vunpack.c.l.b16 %v958
    %v1044 = vunpack.c.l.b16 %v959
    %v1045 = vunpack.c.h.b16 %v959
    %v1046 = vunpack.c.l.b16 %v960
    %v1047 = vunpack.c.l.b16 %v961
    %v1048 = vunpack.c.h.b16 %v961
    %v1049 = vunpack.c.l.b16 %v962
    %v1050 = vunpack.c.l.b16 %v963
    %v1051 = vunpack.c.h.b16 %v963
    %v1052 = vunpack.c.l.b16 %v964
    %v1053 = vunpack.c.l.b16 %v965
    %v1054 = vunpack.c.h.b16 %v965
    %v1055 = vunpack.c.l.b16 %v966
    %v1056 = vunpack.c.l.b16 %v967
    %v1057 = vunpack.c.h.b16 %v967
    %v1058 = vunpack.c.l.b16 %v968
    %v1059 = vunpack.c.l.b16 %v969
    %v1060 = vunpack.c.h.b16 %v969
    %v1061 = vunpack.c.l.b16 %v970
    %v1062 = vunpack.c.l.b16 %v971
    %v1063 = vunpack.c.h.b16 %v971
    %v1064 = vunpack.c.l.b16 %v972
    %v1065 = vunpack.c.l.b16 %v973
    %v1066 = vunpack.c.h.b16 %v973
    %v1067 = vunpack.c.l.b16 %v974
    %v1068 = vunpack.c.l.b16 %v975
    %v1069 = vunpack.c.h.b16 %v975
    %v1070 = vunpack.c.l.b16 %v976
    %v1071 = vunpack.c.l.b16 %v977
    %v1072 = vunpack.c.h.b16 %v977
    %v1073 = vunpack.c.l.b16 %v978
    %v1074 = vunpack.c.l.b16 %v979
    %v1075 = vunpack.c.h.b16 %v979
    %v1076 = vunpack.c.l.b16 %v980
    %v1077 = vunpack.c.l.b16 %v981
    %v1078 = vunpack.c.h.b16 %v981
    %v1079 = vunpack.c.l.b16 %v982
    %v1080 = vunpack.c.l.b16 %v983
    %v1081 = vunpack.c.h.b16 %v983
    %v1082 = vunpack.c.l.b16 %v984
    %v1083 = vpack.c.b16 %v1038, %v1035
    %v1084 = vpack.c.b16 %v1039, %v1036
    %v1085 = vpack.c.b16 %v1040, %v1037
    %v1086 = vpack.c.b16 %v1044, %v1041
    %v1087 = vpack.c.b16 %v1045, %v1042
    %v1088 = vpack.c.b16 %v1046, %v1043
    %v1089 = vpack.c.b16 %v1050, %v1047
    %v1090 = vpack.c.b16 %v1051, %v1048
    %v1091 = vpack.c.b16 %v1052, %v1049
    %v1092 = vpack.c.b16 %v1056, %v1053
    %v1093 = vpack.c.b16 %v1057, %v1054
    %v1094 = vpack.c.b16 %v1058, %v1055
    %v1095 = vpack.c.b16 %v1062, %v1059
    %v1096 = vpack.c.b16 %v1063, %v1060
    %v1097 = vpack.c.b16 %v1064, %v1061
    %v1098 = vpack.c.b16 %v1068, %v1065
    %v1099 = vpack.c.b16 %v1069, %v1066
    %v1100 = vpack.c.b16 %v1070, %v1067
    %v1101 = vpack.c.b16 %v1074, %v1071
    %v1102 = vpack.c.b16 %v1075, %v1072
    %v1103 = vpack.c.b16 %v1076, %v1073
    %v1104 = vpack.c.b16 %v1080, %v1077
    %v1105 = vpack.c.b16 %v1081, %v1078
    %v1106 = vpack.c.b16 %v1082, %v1079
    %1131 = vmatprep.subr.bf16.mxu0 %v1084
    %1132 = vmatpush1.bf16.msra.mxu0 %v1083
    %1133 = vmatprep.subr.bf16.mxu0 %v1087
    %1134 = vmatpush1.bf16.msra.mxu0 %v1086
    %1135 = vmatprep.subr.bf16.mxu0 %v1090
    %1136 = vmatpush1.bf16.msra.mxu0 %v1089
    %1137 = vmatprep.subr.bf16.mxu0 %v1093
    %1138 = vmatpush1.bf16.msra.mxu0 %v1092
    %1139 = vmatprep.subr.bf16.mxu0 %v1096
    %1140 = vmatpush1.bf16.msra.mxu0 %v1095
    %1141 = vmatprep.subr.bf16.mxu0 %v1099
    %1142 = vmatpush1.bf16.msra.mxu0 %v1098
    %1143 = vmatprep.subr.bf16.mxu0 %v1102
    %1144 = vmatpush1.bf16.msra.mxu0 %v1101
    %1145 = vmatprep.subr.bf16.mxu0 %v1105
    %1146 = vmatpush1.bf16.msra.mxu0 %v1104
    %1147 = vmatprep.subr.bf16.mxu0 0
    %1148 = vmatpush1.bf16.msra.mxu0 0
    %1149 = vmatprep.subr.bf16.mxu0 0
    %1150 = vmatpush1.bf16.msra.mxu0 0
    %1151 = vmatprep.subr.bf16.mxu0 0
    %1152 = vmatpush1.bf16.msra.mxu0 0
    %1153 = vmatprep.subr.bf16.mxu0 0
    %1154 = vmatpush1.bf16.msra.mxu0 0
    %1155 = vmatprep.subr.bf16.mxu0 0
    %1156 = vmatpush1.bf16.msra.mxu0 0
    %1157 = vmatprep.subr.bf16.mxu0 0
    %1158 = vmatpush1.bf16.msra.mxu0 0
    %1159 = vmatprep.subr.bf16.mxu0 0
    %1160 = vmatpush1.bf16.msra.mxu0 0
    %1161 = vmatprep.subr.bf16.mxu0 0
    %1162 = vmatpush1.bf16.msra.mxu0 0
    %1163 = vmatprep.mubr.bf16.mxu0 0
    %1164 = vmatmul.mubr.bf16.gmra.mrb[0].mxu0 %v951
    %v1165 = vpop.f32.mrb[0].mxu0
    %v1166 = vadd.f32 %v991, %v1165
    %v1167 = vpop.f32.mrb[0].mxu0
    %v1168 = vadd.f32 %v995, %v1167
    %v1169 = vpop.f32.mrb[0].mxu0
    %v1170 = vadd.f32 %v991, %v1169
    %v1171 = vpop.f32.mrb[0].mxu0
    %v1172 = vadd.f32 %v995, %v1171
    %1173 = vdwg.mxu0
    %1174 = vmatprep.subr.bf16.mxu0 0
    %1175 = vmatpush1.bf16.msra.mxu0 %v1085
    %1176 = vmatprep.subr.bf16.mxu0 0
    %1177 = vmatpush1.bf16.msra.mxu0 %v1088
    %1178 = vmatprep.subr.bf16.mxu0 0
    %1179 = vmatpush1.bf16.msra.mxu0 %v1091
    %1180 = vmatprep.subr.bf16.mxu0 0
    %1181 = vmatpush1.bf16.msra.mxu0 %v1094
    %1182 = vmatprep.subr.bf16.mxu0 0
    %1183 = vmatpush1.bf16.msra.mxu0 %v1097
    %1184 = vmatprep.subr.bf16.mxu0 0
    %1185 = vmatpush1.bf16.msra.mxu0 %v1100
    %1186 = vmatprep.subr.bf16.mxu0 0
    %1187 = vmatpush1.bf16.msra.mxu0 %v1103
    %1188 = vmatprep.subr.bf16.mxu0 0
    %1189 = vmatpush1.bf16.msra.mxu0 %v1106
    %1190 = vmatprep.subr.bf16.mxu0 0
    %1191 = vmatpush1.bf16.msra.mxu0 0
    %1192 = vmatprep.subr.bf16.mxu0 0
    %1193 = vmatpush1.bf16.msra.mxu0 0
    %1194 = vmatprep.subr.bf16.mxu0 0
    %1195 = vmatpush1.bf16.msra.mxu0 0
    %1196 = vmatprep.subr.bf16.mxu0 0
    %1197 = vmatpush1.bf16.msra.mxu0 0
    %1198 = vmatprep.subr.bf16.mxu0 0
    %1199 = vmatpush1.bf16.msra.mxu0 0
    %1200 = vmatprep.subr.bf16.mxu0 0
    %1201 = vmatpush1.bf16.msra.mxu0 0
    %1202 = vmatprep.subr.bf16.mxu0 0
    %1203 = vmatpush1.bf16.msra.mxu0 0
    %1204 = vmatprep.subr.bf16.mxu0 0
    %1205 = vmatpush1.bf16.msra.mxu0 0
    %1206 = vmatprep.mubr.bf16.mxu0 0
    %1207 = vmatmul.mubr.bf16.gmra.mrb[0].mxu0 %v951
    %v1208 = vpop.f32.mrb[0].mxu0
    %v1209 = vadd.f32 %v999, %v1208
    %v1210 = vpop.f32.mrb[0].mxu0
    %v1211 = vpop.f32.mrb[0].mxu0
    %v1212 = vadd.f32 %v999, %v1211
    %v1213 = vpop.f32.mrb[0].mxu0
    %1214 = vdwg.mxu0
    %v1215 = vpack.c.bf16 %v950, %v949
    %s1216 = scalar_lea.vmem [#allocation7], 576
    %v1217 = vld [vmem:[%s1216] sm:$0xff]
    %v1218 = vld [vmem:[%s1216 + $0x8] sm:$0xf]
    %v1219 = vld [vmem:[%s1216 + $0xc] sm:$0xff]
    %v1220 = vld [vmem:[%s1216 + $0x14] sm:$0xf]
    %v1221 = vld [vmem:[%s1216 + $0x18] sm:$0xff]
    %v1222 = vld [vmem:[%s1216 + $0x20] sm:$0xf]
    %v1223 = vld [vmem:[%s1216 + $0x24] sm:$0xff]
    %v1224 = vld [vmem:[%s1216 + $0x2c] sm:$0xf]
    %v1225 = vld [vmem:[%s1216 + $0x30] sm:$0xff]
    %v1226 = vld [vmem:[%s1216 + $0x38] sm:$0xf]
    %v1227 = vld [vmem:[%s1216 + $0x3c] sm:$0xff]
    %v1228 = vld [vmem:[%s1216 + $0x44] sm:$0xf]
    %v1229 = vld [vmem:[%s1216 + $0x48] sm:$0xff]
    %v1230 = vld [vmem:[%s1216 + $0x50] sm:$0xf]
    %v1231 = vld [vmem:[%s1216 + $0x54] sm:$0xff]
    %v1232 = vld [vmem:[%s1216 + $0x5c] sm:$0xf]
    %v1233 = vld [vmem:[%s1216 + $0x60] sm:$0xff]
    %v1234 = vld [vmem:[%s1216 + $0x68] sm:$0xf]
    %v1235 = vld [vmem:[%s1216 + $0x6c] sm:$0xff]
    %v1236 = vld [vmem:[%s1216 + $0x74] sm:$0xf]
    %v1237 = vld [vmem:[%s1216 + $0x78] sm:$0xff]
    %v1238 = vld [vmem:[%s1216 + $0x80] sm:$0xf]
    %v1239 = vld [vmem:[%s1216 + $0x84] sm:$0xff]
    %v1240 = vld [vmem:[%s1216 + $0x8c] sm:$0xf]
    %v1241 = vld [vmem:[%s1216 + $0x90] sm:$0xff]
    %v1242 = vld [vmem:[%s1216 + $0x98] sm:$0xf]
    %v1243 = vld [vmem:[%s1216 + $0x9c] sm:$0xff]
    %v1244 = vld [vmem:[%s1216 + $0xa4] sm:$0xf]
    %v1245 = vld [vmem:[%s1216 + $0xa8] sm:$0xff]
    %v1246 = vld [vmem:[%s1216 + $0xb0] sm:$0xf]
    %v1247 = vld [vmem:[%s1216 + $0xb4] sm:$0xff]
    %v1248 = vld [vmem:[%s1216 + $0xbc] sm:$0xf]
    %s1249 = scalar_lea.vmem %s4, 29
    %v1250 = vld [vmem:[%s1249] ss:$8 sm:$0x7]
    %v1252 = vlaneseq
    %v1253 = vshrl.u32 %v1252, 7
    %v1254 = vsub.s32 0, %v1253
    %v1255 = vrot.slane %v1250, %v1254
    %v1256 = vlaneseq
    %v1257 = vshrl.u32 %v1256, 7
    %v1258 = vsub.s32 1, %v1257
    %v1259 = vrot.slane %v1250, %v1258
    %v1260 = vlaneseq
    %v1261 = vshrl.u32 %v1260, 7
    %v1262 = vsub.s32 2, %v1261
    %v1263 = vrot.slane %v1250, %v1262
    %v1299 = vunpack.c.l.b16 %v1217
    %v1300 = vunpack.c.h.b16 %v1217
    %v1301 = vunpack.c.l.b16 %v1218
    %v1302 = vunpack.c.l.b16 %v1219
    %v1303 = vunpack.c.h.b16 %v1219
    %v1304 = vunpack.c.l.b16 %v1220
    %v1305 = vunpack.c.l.b16 %v1221
    %v1306 = vunpack.c.h.b16 %v1221
    %v1307 = vunpack.c.l.b16 %v1222
    %v1308 = vunpack.c.l.b16 %v1223
    %v1309 = vunpack.c.h.b16 %v1223
    %v1310 = vunpack.c.l.b16 %v1224
    %v1311 = vunpack.c.l.b16 %v1225
    %v1312 = vunpack.c.h.b16 %v1225
    %v1313 = vunpack.c.l.b16 %v1226
    %v1314 = vunpack.c.l.b16 %v1227
    %v1315 = vunpack.c.h.b16 %v1227
    %v1316 = vunpack.c.l.b16 %v1228
    %v1317 = vunpack.c.l.b16 %v1229
    %v1318 = vunpack.c.h.b16 %v1229
    %v1319 = vunpack.c.l.b16 %v1230
    %v1320 = vunpack.c.l.b16 %v1231
    %v1321 = vunpack.c.h.b16 %v1231
    %v1322 = vunpack.c.l.b16 %v1232
    %v1323 = vunpack.c.l.b16 %v1233
    %v1324 = vunpack.c.h.b16 %v1233
    %v1325 = vunpack.c.l.b16 %v1234
    %v1326 = vunpack.c.l.b16 %v1235
    %v1327 = vunpack.c.h.b16 %v1235
    %v1328 = vunpack.c.l.b16 %v1236
    %v1329 = vunpack.c.l.b16 %v1237
    %v1330 = vunpack.c.h.b16 %v1237
    %v1331 = vunpack.c.l.b16 %v1238
    %v1332 = vunpack.c.l.b16 %v1239
    %v1333 = vunpack.c.h.b16 %v1239
    %v1334 = vunpack.c.l.b16 %v1240
    %v1335 = vunpack.c.l.b16 %v1241
    %v1336 = vunpack.c.h.b16 %v1241
    %v1337 = vunpack.c.l.b16 %v1242
    %v1338 = vunpack.c.l.b16 %v1243
    %v1339 = vunpack.c.h.b16 %v1243
    %v1340 = vunpack.c.l.b16 %v1244
    %v1341 = vunpack.c.l.b16 %v1245
    %v1342 = vunpack.c.h.b16 %v1245
    %v1343 = vunpack.c.l.b16 %v1246
    %v1344 = vunpack.c.l.b16 %v1247
    %v1345 = vunpack.c.h.b16 %v1247
    %v1346 = vunpack.c.l.b16 %v1248
    %v1347 = vpack.c.b16 %v1302, %v1299
    %v1348 = vpack.c.b16 %v1303, %v1300
    %v1349 = vpack.c.b16 %v1304, %v1301
    %v1350 = vpack.c.b16 %v1308, %v1305
    %v1351 = vpack.c.b16 %v1309, %v1306
    %v1352 = vpack.c.b16 %v1310, %v1307
    %v1353 = vpack.c.b16 %v1314, %v1311
    %v1354 = vpack.c.b16 %v1315, %v1312
    %v1355 = vpack.c.b16 %v1316, %v1313
    %v1356 = vpack.c.b16 %v1320, %v1317
    %v1357 = vpack.c.b16 %v1321, %v1318
    %v1358 = vpack.c.b16 %v1322, %v1319
    %v1359 = vpack.c.b16 %v1326, %v1323
    %v1360 = vpack.c.b16 %v1327, %v1324
    %v1361 = vpack.c.b16 %v1328, %v1325
    %v1362 = vpack.c.b16 %v1332, %v1329
    %v1363 = vpack.c.b16 %v1333, %v1330
    %v1364 = vpack.c.b16 %v1334, %v1331
    %v1365 = vpack.c.b16 %v1338, %v1335
    %v1366 = vpack.c.b16 %v1339, %v1336
    %v1367 = vpack.c.b16 %v1340, %v1337
    %v1368 = vpack.c.b16 %v1344, %v1341
    %v1369 = vpack.c.b16 %v1345, %v1342
    %v1370 = vpack.c.b16 %v1346, %v1343
    %1395 = vmatprep.subr.bf16.mxu0 %v1348
    %1396 = vmatpush1.bf16.msra.mxu0 %v1347
    %1397 = vmatprep.subr.bf16.mxu0 %v1351
    %1398 = vmatpush1.bf16.msra.mxu0 %v1350
    %1399 = vmatprep.subr.bf16.mxu0 %v1354
    %1400 = vmatpush1.bf16.msra.mxu0 %v1353
    %1401 = vmatprep.subr.bf16.mxu0 %v1357
    %1402 = vmatpush1.bf16.msra.mxu0 %v1356
    %1403 = vmatprep.subr.bf16.mxu0 %v1360
    %1404 = vmatpush1.bf16.msra.mxu0 %v1359
    %1405 = vmatprep.subr.bf16.mxu0 %v1363
    %1406 = vmatpush1.bf16.msra.mxu0 %v1362
    %1407 = vmatprep.subr.bf16.mxu0 %v1366
    %1408 = vmatpush1.bf16.msra.mxu0 %v1365
    %1409 = vmatprep.subr.bf16.mxu0 %v1369
    %1410 = vmatpush1.bf16.msra.mxu0 %v1368
    %1411 = vmatprep.subr.bf16.mxu0 0
    %1412 = vmatpush1.bf16.msra.mxu0 0
    %1413 = vmatprep.subr.bf16.mxu0 0
    %1414 = vmatpush1.bf16.msra.mxu0 0
    %1415 = vmatprep.subr.bf16.mxu0 0
    %1416 = vmatpush1.bf16.msra.mxu0 0
    %1417 = vmatprep.subr.bf16.mxu0 0
    %1418 = vmatpush1.bf16.msra.mxu0 0
    %1419 = vmatprep.subr.bf16.mxu0 0
    %1420 = vmatpush1.bf16.msra.mxu0 0
    %1421 = vmatprep.subr.bf16.mxu0 0
    %1422 = vmatpush1.bf16.msra.mxu0 0
    %1423 = vmatprep.subr.bf16.mxu0 0
    %1424 = vmatpush1.bf16.msra.mxu0 0
    %1425 = vmatprep.subr.bf16.mxu0 0
    %1426 = vmatpush1.bf16.msra.mxu0 0
    %1427 = vmatprep.mubr.bf16.mxu0 0
    %1428 = vmatmul.mubr.bf16.gmra.mrb[0].mxu0 %v1215
    %v1429 = vpop.f32.mrb[0].mxu0
    %v1430 = vadd.f32 %v1255, %v1429
    %v1431 = vpop.f32.mrb[0].mxu0
    %v1432 = vadd.f32 %v1259, %v1431
    %v1433 = vpop.f32.mrb[0].mxu0
    %v1434 = vadd.f32 %v1255, %v1433
    %v1435 = vpop.f32.mrb[0].mxu0
    %v1436 = vadd.f32 %v1259, %v1435
    %1437 = vdwg.mxu0
    %1438 = vmatprep.subr.bf16.mxu0 0
    %1439 = vmatpush1.bf16.msra.mxu0 %v1349
    %1440 = vmatprep.subr.bf16.mxu0 0
    %1441 = vmatpush1.bf16.msra.mxu0 %v1352
    %1442 = vmatprep.subr.bf16.mxu0 0
    %1443 = vmatpush1.bf16.msra.mxu0 %v1355
    %1444 = vmatprep.subr.bf16.mxu0 0
    %1445 = vmatpush1.bf16.msra.mxu0 %v1358
    %1446 = vmatprep.subr.bf16.mxu0 0
    %1447 = vmatpush1.bf16.msra.mxu0 %v1361
    %1448 = vmatprep.subr.bf16.mxu0 0
    %1449 = vmatpush1.bf16.msra.mxu0 %v1364
    %1450 = vmatprep.subr.bf16.mxu0 0
    %1451 = vmatpush1.bf16.msra.mxu0 %v1367
    %1452 = vmatprep.subr.bf16.mxu0 0
    %1453 = vmatpush1.bf16.msra.mxu0 %v1370
    %1454 = vmatprep.subr.bf16.mxu0 0
    %1455 = vmatpush1.bf16.msra.mxu0 0
    %1456 = vmatprep.subr.bf16.mxu0 0
    %1457 = vmatpush1.bf16.msra.mxu0 0
    %1458 = vmatprep.subr.bf16.mxu0 0
    %1459 = vmatpush1.bf16.msra.mxu0 0
    %1460 = vmatprep.subr.bf16.mxu0 0
    %1461 = vmatpush1.bf16.msra.mxu0 0
    %1462 = vmatprep.subr.bf16.mxu0 0
    %1463 = vmatpush1.bf16.msra.mxu0 0
    %1464 = vmatprep.subr.bf16.mxu0 0
    %1465 = vmatpush1.bf16.msra.mxu0 0
    %1466 = vmatprep.subr.bf16.mxu0 0
    %1467 = vmatpush1.bf16.msra.mxu0 0
    %1468 = vmatprep.subr.bf16.mxu0 0
    %1469 = vmatpush1.bf16.msra.mxu0 0
    %1470 = vmatprep.mubr.bf16.mxu0 0
    %1471 = vmatmul.mubr.bf16.gmra.mrb[0].mxu0 %v1215
    %v1472 = vpop.f32.mrb[0].mxu0
    %v1473 = vadd.f32 %v1263, %v1472
    %v1474 = vpop.f32.mrb[0].mxu0
    %v1475 = vpop.f32.mrb[0].mxu0
    %v1476 = vadd.f32 %v1263, %v1475
    %v1477 = vpop.f32.mrb[0].mxu0
    %1478 = vdwg.mxu0
    %v1479 = vadd.f32 %v1166, %v1430
    %v1480 = vadd.f32 %v1170, %v1434
    %v1481 = vxor.u32 %v1479, 2147483648
    %v1482 = vxor.u32 %v1480, 2147483648
    %v1483 = vmul.f32 %v1481, 1.442695
    %v1484 = vpow.pop %v1483
    %v1485 = vmul.f32 %v1482, 1.442695
    %v1486 = vpow.pop %v1485
    %v1487 = vadd.f32 %v1484, 1.0
    %v1488 = vadd.f32 %v1486, 1.0
    %v1489 = vrcp.pop %v1487
    %v1490 = vmul.f32 1.0, %v1489
    %v1491 = vrcp.pop %v1488
    %v1492 = vmul.f32 1.0, %v1491
    %v1493 = vadd.f32 %v1168, %v1432
    %v1494 = vadd.f32 %v1172, %v1436
    %v1495 = vxor.u32 %v1493, 2147483648
    %v1496 = vxor.u32 %v1494, 2147483648
    %v1497 = vmul.f32 %v1495, 1.442695
    %v1498 = vpow.pop %v1497
    %v1499 = vmul.f32 %v1496, 1.442695
    %v1500 = vpow.pop %v1499
    %v1501 = vadd.f32 %v1498, 1.0
    %v1502 = vadd.f32 %v1500, 1.0
    %v1503 = vrcp.pop %v1501
    %v1504 = vmul.f32 1.0, %v1503
    %v1505 = vrcp.pop %v1502
    %v1506 = vmul.f32 1.0, %v1505
    %v1507 = vmul.f32 %v1490, %v1473
    %v1508 = vmul.f32 %v1492, %v1476
    %v1509 = vadd.f32 %v1209, %v1507
    %v1510 = vadd.f32 %v1212, %v1508
    %v1511 = vtanh.pop %v1509
    %v1512 = vtanh.pop %v1510
    %v1513 = vsub.f32 1.0, %v1504
    %v1514 = vsub.f32 1.0, %v1506
    %v1515 = vmul.f32 %v1513, %v1511
    %v1516 = vmul.f32 %v1514, %v1512
    %v1517 = vmul.f32 %v1504, %v949
    %v1518 = vmul.f32 %v1506, %v950
    %v1519 = vadd.f32 %v1515, %v1517
    %v1520 = vadd.f32 %v1516, %v1518
    %v1521 = vld [vmem:[%s79] sm:$0xff]
    %v1522 = vld [vmem:[%s79 + $0x8] sm:$0x3]
    %v1523 = vpack.c.bf16 %v1520, %v1519
    %s1524 = scalar_lea.vmem [#allocation7], 768
    %v1525 = vld [vmem:[%s1524] sm:$0xff]
    %v1526 = vld [vmem:[%s1524 + $0x8] sm:$0xf]
    %v1527 = vld [vmem:[%s1524 + $0xc] sm:$0xff]
    %v1528 = vld [vmem:[%s1524 + $0x14] sm:$0xf]
    %v1529 = vld [vmem:[%s1524 + $0x18] sm:$0xff]
    %v1530 = vld [vmem:[%s1524 + $0x20] sm:$0xf]
    %v1531 = vld [vmem:[%s1524 + $0x24] sm:$0xff]
    %v1532 = vld [vmem:[%s1524 + $0x2c] sm:$0xf]
    %v1533 = vld [vmem:[%s1524 + $0x30] sm:$0xff]
    %v1534 = vld [vmem:[%s1524 + $0x38] sm:$0xf]
    %v1535 = vld [vmem:[%s1524 + $0x3c] sm:$0xff]
    %v1536 = vld [vmem:[%s1524 + $0x44] sm:$0xf]
    %v1537 = vld [vmem:[%s1524 + $0x48] sm:$0xff]
    %v1538 = vld [vmem:[%s1524 + $0x50] sm:$0xf]
    %v1539 = vld [vmem:[%s1524 + $0x54] sm:$0xff]
    %v1540 = vld [vmem:[%s1524 + $0x5c] sm:$0xf]
    %v1541 = vld [vmem:[%s1524 + $0x60] sm:$0xff]
    %v1542 = vld [vmem:[%s1524 + $0x68] sm:$0xf]
    %v1543 = vld [vmem:[%s1524 + $0x6c] sm:$0xff]
    %v1544 = vld [vmem:[%s1524 + $0x74] sm:$0xf]
    %v1545 = vld [vmem:[%s1524 + $0x78] sm:$0xff]
    %v1546 = vld [vmem:[%s1524 + $0x80] sm:$0xf]
    %v1547 = vld [vmem:[%s1524 + $0x84] sm:$0xff]
    %v1548 = vld [vmem:[%s1524 + $0x8c] sm:$0xf]
    %v1549 = vld [vmem:[%s1524 + $0x90] sm:$0xff]
    %v1550 = vld [vmem:[%s1524 + $0x98] sm:$0xf]
    %v1551 = vld [vmem:[%s1524 + $0x9c] sm:$0xff]
    %v1552 = vld [vmem:[%s1524 + $0xa4] sm:$0xf]
    %v1553 = vld [vmem:[%s1524 + $0xa8] sm:$0xff]
    %v1554 = vld [vmem:[%s1524 + $0xb0] sm:$0xf]
    %v1555 = vld [vmem:[%s1524 + $0xb4] sm:$0xff]
    %v1556 = vld [vmem:[%s1524 + $0xbc] sm:$0xf]
    %s1557 = scalar_lea.vmem %s4, 30
    %v1558 = vld [vmem:[%s1557] ss:$8 sm:$0x7]
    %v1560 = vlaneseq
    %v1561 = vshrl.u32 %v1560, 7
    %v1562 = vsub.s32 0, %v1561
    %v1563 = vrot.slane %v1558, %v1562
    %v1564 = vlaneseq
    %v1565 = vshrl.u32 %v1564, 7
    %v1566 = vsub.s32 1, %v1565
    %v1567 = vrot.slane %v1558, %v1566
    %v1568 = vlaneseq
    %v1569 = vshrl.u32 %v1568, 7
    %v1570 = vsub.s32 2, %v1569
    %v1571 = vrot.slane %v1558, %v1570
    %v1607 = vunpack.c.l.b16 %v1525
    %v1608 = vunpack.c.h.b16 %v1525
    %v1609 = vunpack.c.l.b16 %v1526
    %v1610 = vunpack.c.l.b16 %v1527
    %v1611 = vunpack.c.h.b16 %v1527
    %v1612 = vunpack.c.l.b16 %v1528
    %v1613 = vunpack.c.l.b16 %v1529
    %v1614 = vunpack.c.h.b16 %v1529
    %v1615 = vunpack.c.l.b16 %v1530
    %v1616 = vunpack.c.l.b16 %v1531
    %v1617 = vunpack.c.h.b16 %v1531
    %v1618 = vunpack.c.l.b16 %v1532
    %v1619 = vunpack.c.l.b16 %v1533
    %v1620 = vunpack.c.h.b16 %v1533
    %v1621 = vunpack.c.l.b16 %v1534
    %v1622 = vunpack.c.l.b16 %v1535
    %v1623 = vunpack.c.h.b16 %v1535
    %v1624 = vunpack.c.l.b16 %v1536
    %v1625 = vunpack.c.l.b16 %v1537
    %v1626 = vunpack.c.h.b16 %v1537
    %v1627 = vunpack.c.l.b16 %v1538
    %v1628 = vunpack.c.l.b16 %v1539
    %v1629 = vunpack.c.h.b16 %v1539
    %v1630 = vunpack.c.l.b16 %v1540
    %v1631 = vunpack.c.l.b16 %v1541
    %v1632 = vunpack.c.h.b16 %v1541
    %v1633 = vunpack.c.l.b16 %v1542
    %v1634 = vunpack.c.l.b16 %v1543
    %v1635 = vunpack.c.h.b16 %v1543
    %v1636 = vunpack.c.l.b16 %v1544
    %v1637 = vunpack.c.l.b16 %v1545
    %v1638 = vunpack.c.h.b16 %v1545
    %v1639 = vunpack.c.l.b16 %v1546
    %v1640 = vunpack.c.l.b16 %v1547
    %v1641 = vunpack.c.h.b16 %v1547
    %v1642 = vunpack.c.l.b16 %v1548
    %v1643 = vunpack.c.l.b16 %v1549
    %v1644 = vunpack.c.h.b16 %v1549
    %v1645 = vunpack.c.l.b16 %v1550
    %v1646 = vunpack.c.l.b16 %v1551
    %v1647 = vunpack.c.h.b16 %v1551
    %v1648 = vunpack.c.l.b16 %v1552
    %v1649 = vunpack.c.l.b16 %v1553
    %v1650 = vunpack.c.h.b16 %v1553
    %v1651 = vunpack.c.l.b16 %v1554
    %v1652 = vunpack.c.l.b16 %v1555
    %v1653 = vunpack.c.h.b16 %v1555
    %v1654 = vunpack.c.l.b16 %v1556
    %v1655 = vpack.c.b16 %v1610, %v1607
    %v1656 = vpack.c.b16 %v1611, %v1608
    %v1657 = vpack.c.b16 %v1612, %v1609
    %v1658 = vpack.c.b16 %v1616, %v1613
    %v1659 = vpack.c.b16 %v1617, %v1614
    %v1660 = vpack.c.b16 %v1618, %v1615
    %v1661 = vpack.c.b16 %v1622, %v1619
    %v1662 = vpack.c.b16 %v1623, %v1620
    %v1663 = vpack.c.b16 %v1624, %v1621
    %v1664 = vpack.c.b16 %v1628, %v1625
    %v1665 = vpack.c.b16 %v1629, %v1626
    %v1666 = vpack.c.b16 %v1630, %v1627
    %v1667 = vpack.c.b16 %v1634, %v1631
    %v1668 = vpack.c.b16 %v1635, %v1632
    %v1669 = vpack.c.b16 %v1636, %v1633
    %v1670 = vpack.c.b16 %v1640, %v1637
    %v1671 = vpack.c.b16 %v1641, %v1638
    %v1672 = vpack.c.b16 %v1642, %v1639
    %v1673 = vpack.c.b16 %v1646, %v1643
    %v1674 = vpack.c.b16 %v1647, %v1644
    %v1675 = vpack.c.b16 %v1648, %v1645
    %v1676 = vpack.c.b16 %v1652, %v1649
    %v1677 = vpack.c.b16 %v1653, %v1650
    %v1678 = vpack.c.b16 %v1654, %v1651
    %1703 = vmatprep.subr.bf16.mxu0 %v1656
    %1704 = vmatpush1.bf16.msra.mxu0 %v1655
    %1705 = vmatprep.subr.bf16.mxu0 %v1659
    %1706 = vmatpush1.bf16.msra.mxu0 %v1658
    %1707 = vmatprep.subr.bf16.mxu0 %v1662
    %1708 = vmatpush1.bf16.msra.mxu0 %v1661
    %1709 = vmatprep.subr.bf16.mxu0 %v1665
    %1710 = vmatpush1.bf16.msra.mxu0 %v1664
    %1711 = vmatprep.subr.bf16.mxu0 %v1668
    %1712 = vmatpush1.bf16.msra.mxu0 %v1667
    %1713 = vmatprep.subr.bf16.mxu0 %v1671
    %1714 = vmatpush1.bf16.msra.mxu0 %v1670
    %1715 = vmatprep.subr.bf16.mxu0 %v1674
    %1716 = vmatpush1.bf16.msra.mxu0 %v1673
    %1717 = vmatprep.subr.bf16.mxu0 %v1677
    %1718 = vmatpush1.bf16.msra.mxu0 %v1676
    %1719 = vmatprep.subr.bf16.mxu0 0
    %1720 = vmatpush1.bf16.msra.mxu0 0
    %1721 = vmatprep.subr.bf16.mxu0 0
    %1722 = vmatpush1.bf16.msra.mxu0 0
    %1723 = vmatprep.subr.bf16.mxu0 0
    %1724 = vmatpush1.bf16.msra.mxu0 0
    %1725 = vmatprep.subr.bf16.mxu0 0
    %1726 = vmatpush1.bf16.msra.mxu0 0
    %1727 = vmatprep.subr.bf16.mxu0 0
    %1728 = vmatpush1.bf16.msra.mxu0 0
    %1729 = vmatprep.subr.bf16.mxu0 0
    %1730 = vmatpush1.bf16.msra.mxu0 0
    %1731 = vmatprep.subr.bf16.mxu0 0
    %1732 = vmatpush1.bf16.msra.mxu0 0
    %1733 = vmatprep.subr.bf16.mxu0 0
    %1734 = vmatpush1.bf16.msra.mxu0 0
    %1735 = vmatprep.mubr.bf16.mxu0 0
    %1736 = vmatmul.mubr.bf16.gmra.mrb[0].mxu0 %v1523
    %v1737 = vpop.f32.mrb[0].mxu0
    %v1738 = vadd.f32 %v1563, %v1737
    %v1739 = vpop.f32.mrb[0].mxu0
    %v1740 = vadd.f32 %v1567, %v1739
    %v1741 = vpop.f32.mrb[0].mxu0
    %v1742 = vadd.f32 %v1563, %v1741
    %v1743 = vpop.f32.mrb[0].mxu0
    %v1744 = vadd.f32 %v1567, %v1743
    %1745 = vdwg.mxu0
    %1746 = vmatprep.subr.bf16.mxu0 0
    %1747 = vmatpush1.bf16.msra.mxu0 %v1657
    %1748 = vmatprep.subr.bf16.mxu0 0
    %1749 = vmatpush1.bf16.msra.mxu0 %v1660
    %1750 = vmatprep.subr.bf16.mxu0 0
    %1751 = vmatpush1.bf16.msra.mxu0 %v1663
    %1752 = vmatprep.subr.bf16.mxu0 0
    %1753 = vmatpush1.bf16.msra.mxu0 %v1666
    %1754 = vmatprep.subr.bf16.mxu0 0
    %1755 = vmatpush1.bf16.msra.mxu0 %v1669
    %1756 = vmatprep.subr.bf16.mxu0 0
    %1757 = vmatpush1.bf16.msra.mxu0 %v1672
    %1758 = vmatprep.subr.bf16.mxu0 0
    %1759 = vmatpush1.bf16.msra.mxu0 %v1675
    %1760 = vmatprep.subr.bf16.mxu0 0
    %1761 = vmatpush1.bf16.msra.mxu0 %v1678
    %1762 = vmatprep.subr.bf16.mxu0 0
    %1763 = vmatpush1.bf16.msra.mxu0 0
    %1764 = vmatprep.subr.bf16.mxu0 0
    %1765 = vmatpush1.bf16.msra.mxu0 0
    %1766 = vmatprep.subr.bf16.mxu0 0
    %1767 = vmatpush1.bf16.msra.mxu0 0
    %1768 = vmatprep.subr.bf16.mxu0 0
    %1769 = vmatpush1.bf16.msra.mxu0 0
    %1770 = vmatprep.subr.bf16.mxu0 0
    %1771 = vmatpush1.bf16.msra.mxu0 0
    %1772 = vmatprep.subr.bf16.mxu0 0
    %1773 = vmatpush1.bf16.msra.mxu0 0
    %1774 = vmatprep.subr.bf16.mxu0 0
    %1775 = vmatpush1.bf16.msra.mxu0 0
    %1776 = vmatprep.subr.bf16.mxu0 0
    %1777 = vmatpush1.bf16.msra.mxu0 0
    %1778 = vmatprep.mubr.bf16.mxu0 0
    %1779 = vmatmul.mubr.bf16.gmra.mrb[0].mxu0 %v1523
    %v1780 = vpop.f32.mrb[0].mxu0
    %v1781 = vadd.f32 %v1571, %v1780
    %v1782 = vpop.f32.mrb[0].mxu0
    %v1783 = vpop.f32.mrb[0].mxu0
    %v1784 = vadd.f32 %v1571, %v1783
    %v1785 = vpop.f32.mrb[0].mxu0
    %1786 = vdwg.mxu0
    %v1787 = vpack.c.bf16 %v1522, %v1521
    %s1788 = scalar_lea.vmem [#allocation7], 960
    %v1789 = vld [vmem:[%s1788] sm:$0xff]
    %v1790 = vld [vmem:[%s1788 + $0x8] sm:$0xf]
    %v1791 = vld [vmem:[%s1788 + $0xc] sm:$0xff]
    %v1792 = vld [vmem:[%s1788 + $0x14] sm:$0xf]
    %v1793 = vld [vmem:[%s1788 + $0x18] sm:$0xff]
    %v1794 = vld [vmem:[%s1788 + $0x20] sm:$0xf]
    %v1795 = vld [vmem:[%s1788 + $0x24] sm:$0xff]
    %v1796 = vld [vmem:[%s1788 + $0x2c] sm:$0xf]
    %v1797 = vld [vmem:[%s1788 + $0x30] sm:$0xff]
    %v1798 = vld [vmem:[%s1788 + $0x38] sm:$0xf]
    %v1799 = vld [vmem:[%s1788 + $0x3c] sm:$0xff]
    %v1800 = vld [vmem:[%s1788 + $0x44] sm:$0xf]
    %v1801 = vld [vmem:[%s1788 + $0x48] sm:$0xff]
    %v1802 = vld [vmem:[%s1788 + $0x50] sm:$0xf]
    %v1803 = vld [vmem:[%s1788 + $0x54] sm:$0xff]
    %v1804 = vld [vmem:[%s1788 + $0x5c] sm:$0xf]
    %v1805 = vld [vmem:[%s1788 + $0x60] sm:$0xff]
    %v1806 = vld [vmem:[%s1788 + $0x68] sm:$0xf]
    %v1807 = vld [vmem:[%s1788 + $0x6c] sm:$0xff]
    %v1808 = vld [vmem:[%s1788 + $0x74] sm:$0xf]
    %v1809 = vld [vmem:[%s1788 + $0x78] sm:$0xff]
    %v1810 = vld [vmem:[%s1788 + $0x80] sm:$0xf]
    %v1811 = vld [vmem:[%s1788 + $0x84] sm:$0xff]
    %v1812 = vld [vmem:[%s1788 + $0x8c] sm:$0xf]
    %v1813 = vld [vmem:[%s1788 + $0x90] sm:$0xff]
    %v1814 = vld [vmem:[%s1788 + $0x98] sm:$0xf]
    %v1815 = vld [vmem:[%s1788 + $0x9c] sm:$0xff]
    %v1816 = vld [vmem:[%s1788 + $0xa4] sm:$0xf]
    %v1817 = vld [vmem:[%s1788 + $0xa8] sm:$0xff]
    %v1818 = vld [vmem:[%s1788 + $0xb0] sm:$0xf]
    %v1819 = vld [vmem:[%s1788 + $0xb4] sm:$0xff]
    %v1820 = vld [vmem:[%s1788 + $0xbc] sm:$0xf]
    %s1821 = scalar_lea.vmem %s4, 31
    %v1822 = vld [vmem:[%s1821] ss:$8 sm:$0x7]
    %v1824 = vlaneseq
    %v1825 = vshrl.u32 %v1824, 7
    %v1826 = vsub.s32 0, %v1825
    %v1827 = vrot.slane %v1822, %v1826
    %v1828 = vlaneseq
    %v1829 = vshrl.u32 %v1828, 7
    %v1830 = vsub.s32 1, %v1829
    %v1831 = vrot.slane %v1822, %v1830
    %v1832 = vlaneseq
    %v1833 = vshrl.u32 %v1832, 7
    %v1834 = vsub.s32 2, %v1833
    %v1835 = vrot.slane %v1822, %v1834
    %v1871 = vunpack.c.l.b16 %v1789
    %v1872 = vunpack.c.h.b16 %v1789
    %v1873 = vunpack.c.l.b16 %v1790
    %v1874 = vunpack.c.l.b16 %v1791
    %v1875 = vunpack.c.h.b16 %v1791
    %v1876 = vunpack.c.l.b16 %v1792
    %v1877 = vunpack.c.l.b16 %v1793
    %v1878 = vunpack.c.h.b16 %v1793
    %v1879 = vunpack.c.l.b16 %v1794
    %v1880 = vunpack.c.l.b16 %v1795
    %v1881 = vunpack.c.h.b16 %v1795
    %v1882 = vunpack.c.l.b16 %v1796
    %v1883 = vunpack.c.l.b16 %v1797
    %v1884 = vunpack.c.h.b16 %v1797
    %v1885 = vunpack.c.l.b16 %v1798
    %v1886 = vunpack.c.l.b16 %v1799
    %v1887 = vunpack.c.h.b16 %v1799
    %v1888 = vunpack.c.l.b16 %v1800
    %v1889 = vunpack.c.l.b16 %v1801
    %v1890 = vunpack.c.h.b16 %v1801
    %v1891 = vunpack.c.l.b16 %v1802
    %v1892 = vunpack.c.l.b16 %v1803
    %v1893 = vunpack.c.h.b16 %v1803
    %v1894 = vunpack.c.l.b16 %v1804
    %v1895 = vunpack.c.l.b16 %v1805
    %v1896 = vunpack.c.h.b16 %v1805
    %v1897 = vunpack.c.l.b16 %v1806
    %v1898 = vunpack.c.l.b16 %v1807
    %v1899 = vunpack.c.h.b16 %v1807
    %v1900 = vunpack.c.l.b16 %v1808
    %v1901 = vunpack.c.l.b16 %v1809
    %v1902 = vunpack.c.h.b16 %v1809
    %v1903 = vunpack.c.l.b16 %v1810
    %v1904 = vunpack.c.l.b16 %v1811
    %v1905 = vunpack.c.h.b16 %v1811
    %v1906 = vunpack.c.l.b16 %v1812
    %v1907 = vunpack.c.l.b16 %v1813
    %v1908 = vunpack.c.h.b16 %v1813
    %v1909 = vunpack.c.l.b16 %v1814
    %v1910 = vunpack.c.l.b16 %v1815
    %v1911 = vunpack.c.h.b16 %v1815
    %v1912 = vunpack.c.l.b16 %v1816
    %v1913 = vunpack.c.l.b16 %v1817
    %v1914 = vunpack.c.h.b16 %v1817
    %v1915 = vunpack.c.l.b16 %v1818
    %v1916 = vunpack.c.l.b16 %v1819
    %v1917 = vunpack.c.h.b16 %v1819
    %v1918 = vunpack.c.l.b16 %v1820
    %v1919 = vpack.c.b16 %v1874, %v1871
    %v1920 = vpack.c.b16 %v1875, %v1872
    %v1921 = vpack.c.b16 %v1876, %v1873
    %v1922 = vpack.c.b16 %v1880, %v1877
    %v1923 = vpack.c.b16 %v1881, %v1878
    %v1924 = vpack.c.b16 %v1882, %v1879
    %v1925 = vpack.c.b16 %v1886, %v1883
    %v1926 = vpack.c.b16 %v1887, %v1884
    %v1927 = vpack.c.b16 %v1888, %v1885
    %v1928 = vpack.c.b16 %v1892, %v1889
    %v1929 = vpack.c.b16 %v1893, %v1890
    %v1930 = vpack.c.b16 %v1894, %v1891
    %v1931 = vpack.c.b16 %v1898, %v1895
    %v1932 = vpack.c.b16 %v1899, %v1896
    %v1933 = vpack.c.b16 %v1900, %v1897
    %v1934 = vpack.c.b16 %v1904, %v1901
    %v1935 = vpack.c.b16 %v1905, %v1902
    %v1936 = vpack.c.b16 %v1906, %v1903
    %v1937 = vpack.c.b16 %v1910, %v1907
    %v1938 = vpack.c.b16 %v1911, %v1908
    %v1939 = vpack.c.b16 %v1912, %v1909
    %v1940 = vpack.c.b16 %v1916, %v1913
    %v1941 = vpack.c.b16 %v1917, %v1914
    %v1942 = vpack.c.b16 %v1918, %v1915
    %1967 = vmatprep.subr.bf16.mxu0 %v1920
    %1968 = vmatpush1.bf16.msra.mxu0 %v1919
    %1969 = vmatprep.subr.bf16.mxu0 %v1923
    %1970 = vmatpush1.bf16.msra.mxu0 %v1922
    %1971 = vmatprep.subr.bf16.mxu0 %v1926
    %1972 = vmatpush1.bf16.msra.mxu0 %v1925
    %1973 = vmatprep.subr.bf16.mxu0 %v1929
    %1974 = vmatpush1.bf16.msra.mxu0 %v1928
    %1975 = vmatprep.subr.bf16.mxu0 %v1932
    %1976 = vmatpush1.bf16.msra.mxu0 %v1931
    %1977 = vmatprep.subr.bf16.mxu0 %v1935
    %1978 = vmatpush1.bf16.msra.mxu0 %v1934
    %1979 = vmatprep.subr.bf16.mxu0 %v1938
    %1980 = vmatpush1.bf16.msra.mxu0 %v1937
    %1981 = vmatprep.subr.bf16.mxu0 %v1941
    %1982 = vmatpush1.bf16.msra.mxu0 %v1940
    %1983 = vmatprep.subr.bf16.mxu0 0
    %1984 = vmatpush1.bf16.msra.mxu0 0
    %1985 = vmatprep.subr.bf16.mxu0 0
    %1986 = vmatpush1.bf16.msra.mxu0 0
    %1987 = vmatprep.subr.bf16.mxu0 0
    %1988 = vmatpush1.bf16.msra.mxu0 0
    %1989 = vmatprep.subr.bf16.mxu0 0
    %1990 = vmatpush1.bf16.msra.mxu0 0
    %1991 = vmatprep.subr.bf16.mxu0 0
    %1992 = vmatpush1.bf16.msra.mxu0 0
    %1993 = vmatprep.subr.bf16.mxu0 0
    %1994 = vmatpush1.bf16.msra.mxu0 0
    %1995 = vmatprep.subr.bf16.mxu0 0
    %1996 = vmatpush1.bf16.msra.mxu0 0
    %1997 = vmatprep.subr.bf16.mxu0 0
    %1998 = vmatpush1.bf16.msra.mxu0 0
    %1999 = vmatprep.mubr.bf16.mxu0 0
    %2000 = vmatmul.mubr.bf16.gmra.mrb[0].mxu0 %v1787
    %v2001 = vpop.f32.mrb[0].mxu0
    %v2002 = vadd.f32 %v1827, %v2001
    %v2003 = vpop.f32.mrb[0].mxu0
    %v2004 = vadd.f32 %v1831, %v2003
    %v2005 = vpop.f32.mrb[0].mxu0
    %v2006 = vadd.f32 %v1827, %v2005
    %v2007 = vpop.f32.mrb[0].mxu0
    %v2008 = vadd.f32 %v1831, %v2007
    %2009 = vdwg.mxu0
    %2010 = vmatprep.subr.bf16.mxu0 0
    %2011 = vmatpush1.bf16.msra.mxu0 %v1921
    %2012 = vmatprep.subr.bf16.mxu0 0
    %2013 = vmatpush1.bf16.msra.mxu0 %v1924
    %2014 = vmatprep.subr.bf16.mxu0 0
    %2015 = vmatpush1.bf16.msra.mxu0 %v1927
    %2016 = vmatprep.subr.bf16.mxu0 0
    %2017 = vmatpush1.bf16.msra.mxu0 %v1930
    %2018 = vmatprep.subr.bf16.mxu0 0
    %2019 = vmatpush1.bf16.msra.mxu0 %v1933
    %2020 = vmatprep.subr.bf16.mxu0 0
    %2021 = vmatpush1.bf16.msra.mxu0 %v1936
    %2022 = vmatprep.subr.bf16.mxu0 0
    %2023 = vmatpush1.bf16.msra.mxu0 %v1939
    %2024 = vmatprep.subr.bf16.mxu0 0
    %2025 = vmatpush1.bf16.msra.mxu0 %v1942
    %2026 = vmatprep.subr.bf16.mxu0 0
    %2027 = vmatpush1.bf16.msra.mxu0 0
    %2028 = vmatprep.subr.bf16.mxu0 0
    %2029 = vmatpush1.bf16.msra.mxu0 0
    %2030 = vmatprep.subr.bf16.mxu0 0
    %2031 = vmatpush1.bf16.msra.mxu0 0
    %2032 = vmatprep.subr.bf16.mxu0 0
    %2033 = vmatpush1.bf16.msra.mxu0 0
    %2034 = vmatprep.subr.bf16.mxu0 0
    %2035 = vmatpush1.bf16.msra.mxu0 0
    %2036 = vmatprep.subr.bf16.mxu0 0
    %2037 = vmatpush1.bf16.msra.mxu0 0
    %2038 = vmatprep.subr.bf16.mxu0 0
    %2039 = vmatpush1.bf16.msra.mxu0 0
    %2040 = vmatprep.subr.bf16.mxu0 0
    %2041 = vmatpush1.bf16.msra.mxu0 0
    %2042 = vmatprep.mubr.bf16.mxu0 0
    %2043 = vmatmul.mubr.bf16.gmra.mrb[0].mxu0 %v1787
    %v2044 = vpop.f32.mrb[0].mxu0
    %v2045 = vadd.f32 %v1835, %v2044
    %v2046 = vpop.f32.mrb[0].mxu0
    %v2047 = vpop.f32.mrb[0].mxu0
    %v2048 = vadd.f32 %v1835, %v2047
    %v2049 = vpop.f32.mrb[0].mxu0
    %2050 = vdwg.mxu0
    %v2051 = vadd.f32 %v1738, %v2002
    %v2052 = vadd.f32 %v1742, %v2006
    %v2053 = vxor.u32 %v2051, 2147483648
    %v2054 = vxor.u32 %v2052, 2147483648
    %v2055 = vmul.f32 %v2053, 1.442695
    %v2056 = vpow.pop %v2055
    %v2057 = vmul.f32 %v2054, 1.442695
    %v2058 = vpow.pop %v2057
    %v2059 = vadd.f32 %v2056, 1.0
    %v2060 = vadd.f32 %v2058, 1.0
    %v2061 = vrcp.pop %v2059
    %v2062 = vmul.f32 1.0, %v2061
    %v2063 = vrcp.pop %v2060
    %v2064 = vmul.f32 1.0, %v2063
    %v2065 = vadd.f32 %v1740, %v2004
    %v2066 = vadd.f32 %v1744, %v2008
    %v2067 = vxor.u32 %v2065, 2147483648
    %v2068 = vxor.u32 %v2066, 2147483648
    %v2069 = vmul.f32 %v2067, 1.442695
    %v2070 = vpow.pop %v2069
    %v2071 = vmul.f32 %v2068, 1.442695
    %v2072 = vpow.pop %v2071
    %v2073 = vadd.f32 %v2070, 1.0
    %v2074 = vadd.f32 %v2072, 1.0
    %v2075 = vrcp.pop %v2073
    %v2076 = vmul.f32 1.0, %v2075
    %v2077 = vrcp.pop %v2074
    %v2078 = vmul.f32 1.0, %v2077
    %v2079 = vmul.f32 %v2062, %v2045
    %v2080 = vmul.f32 %v2064, %v2048
    %v2081 = vadd.f32 %v1781, %v2079
    %v2082 = vadd.f32 %v1784, %v2080
    %v2083 = vtanh.pop %v2081
    %v2084 = vtanh.pop %v2082
    %v2085 = vsub.f32 1.0, %v2076
    %v2086 = vsub.f32 1.0, %v2078
    %v2087 = vmul.f32 %v2085, %v2083
    %v2088 = vmul.f32 %v2086, %v2084
    %v2089 = vmul.f32 %v2076, %v1521
    %v2090 = vmul.f32 %v2078, %v1522
    %v2091 = vadd.f32 %v2087, %v2089
    %v2092 = vadd.f32 %v2088, %v2090
    %s2093 = scalar_lea.vmem [#allocation7], 1152
    %v2094 = vld [vmem:[%s2093] sm:$0xf]
    %v2095 = vld [vmem:[%s2093 + $0xc] sm:$0xf]
    %v2096 = vld [vmem:[%s2093 + $0x18] sm:$0xf]
    %v2097 = vld [vmem:[%s2093 + $0x24] sm:$0xf]
    %v2098 = vld [vmem:[%s2093 + $0x30] sm:$0xf]
    %v2099 = vld [vmem:[%s2093 + $0x3c] sm:$0xf]
    %v2100 = vld [vmem:[%s2093 + $0x48] sm:$0xf]
    %v2101 = vld [vmem:[%s2093 + $0x54] sm:$0xf]
    %v2102 = vld [vmem:[%s2093 + $0x60] sm:$0xf]
    %v2103 = vld [vmem:[%s2093 + $0x6c] sm:$0xf]
    %v2104 = vld [vmem:[%s2093 + $0x78] sm:$0xf]
    %v2105 = vld [vmem:[%s2093 + $0x84] sm:$0xf]
    %v2106 = vld [vmem:[%s2093 + $0x90] sm:$0xf]
    %v2107 = vld [vmem:[%s2093 + $0x9c] sm:$0xf]
    %v2108 = vld [vmem:[%s2093 + $0xa8] sm:$0xf]
    %v2109 = vld [vmem:[%s2093 + $0xb4] sm:$0xf]
    %v2110 = vld [vmem:[%s4 + $0x30] ss:$0 sm:$0xff]
    %v2111 = vpack.c.bf16 %v2092, %v2091
    %v2128 = vunpack.c.l.b16 %v2094
    %v2129 = vunpack.c.l.b16 %v2095
    %v2130 = vunpack.c.l.b16 %v2096
    %v2131 = vunpack.c.l.b16 %v2097
    %v2132 = vunpack.c.l.b16 %v2098
    %v2133 = vunpack.c.l.b16 %v2099
    %v2134 = vunpack.c.l.b16 %v2100
    %v2135 = vunpack.c.l.b16 %v2101
    %v2136 = vunpack.c.l.b16 %v2102
    %v2137 = vunpack.c.l.b16 %v2103
    %v2138 = vunpack.c.l.b16 %v2104
    %v2139 = vunpack.c.l.b16 %v2105
    %v2140 = vunpack.c.l.b16 %v2106
    %v2141 = vunpack.c.l.b16 %v2107
    %v2142 = vunpack.c.l.b16 %v2108
    %v2143 = vunpack.c.l.b16 %v2109
    %v2144 = vpack.c.b16 %v2129, %v2128
    %v2145 = vpack.c.b16 %v2131, %v2130
    %v2146 = vpack.c.b16 %v2133, %v2132
    %v2147 = vpack.c.b16 %v2135, %v2134
    %v2148 = vpack.c.b16 %v2137, %v2136
    %v2149 = vpack.c.b16 %v2139, %v2138
    %v2150 = vpack.c.b16 %v2141, %v2140
    %v2151 = vpack.c.b16 %v2143, %v2142
    %2160 = vmatprep.subr.bf16.mxu0 0
    %2161 = vmatpush1.bf16.msra.mxu0 %v2144
    %2162 = vmatprep.subr.bf16.mxu0 0
    %2163 = vmatpush1.bf16.msra.mxu0 %v2145
    %2164 = vmatprep.subr.bf16.mxu0 0
    %2165 = vmatpush1.bf16.msra.mxu0 %v2146
    %2166 = vmatprep.subr.bf16.mxu0 0
    %2167 = vmatpush1.bf16.msra.mxu0 %v2147
    %2168 = vmatprep.subr.bf16.mxu0 0
    %2169 = vmatpush1.bf16.msra.mxu0 %v2148
    %2170 = vmatprep.subr.bf16.mxu0 0
    %2171 = vmatpush1.bf16.msra.mxu0 %v2149
    %2172 = vmatprep.subr.bf16.mxu0 0
    %2173 = vmatpush1.bf16.msra.mxu0 %v2150
    %2174 = vmatprep.subr.bf16.mxu0 0
    %2175 = vmatpush1.bf16.msra.mxu0 %v2151
    %2176 = vmatprep.subr.bf16.mxu0 0
    %2177 = vmatpush1.bf16.msra.mxu0 0
    %2178 = vmatprep.subr.bf16.mxu0 0
    %2179 = vmatpush1.bf16.msra.mxu0 0
    %2180 = vmatprep.subr.bf16.mxu0 0
    %2181 = vmatpush1.bf16.msra.mxu0 0
    %2182 = vmatprep.subr.bf16.mxu0 0
    %2183 = vmatpush1.bf16.msra.mxu0 0
    %2184 = vmatprep.subr.bf16.mxu0 0
    %2185 = vmatpush1.bf16.msra.mxu0 0
    %2186 = vmatprep.subr.bf16.mxu0 0
    %2187 = vmatpush1.bf16.msra.mxu0 0
    %2188 = vmatprep.subr.bf16.mxu0 0
    %2189 = vmatpush1.bf16.msra.mxu0 0
    %2190 = vmatprep.subr.bf16.mxu0 0
    %2191 = vmatpush1.bf16.msra.mxu0 0
    %2192 = vmatprep.mubr.bf16.mxu0 0
    %2193 = vmatmul.mubr.bf16.gmra.mrb[0].mxu0 %v2111
    %v2194 = vpop.f32.mrb[0].mxu0
    %v2195 = vadd.f32 %v2110, %v2194
    %v2196 = vpop.f32.mrb[0].mxu0
    %v2197 = vpop.f32.mrb[0].mxu0
    %v2198 = vadd.f32 %v2110, %v2197
    %v2199 = vpop.f32.mrb[0].mxu0
    %2200 = vdwg.mxu0
    %2201 = vst [vmem:[#allocation8] sm:$0xff] %v2195
    %2202 = vst [vmem:[#allocation8 + $0x8] sm:$0x3] %v2198
    // Predicated region
    $region30: #{rganet1_forward.1} parent=1 // pred_check
      _
    $region31: #{rganet1_forward.1} parent=1 // pred_check_branch
      %2204 = sbr.rel (0) target = $region33
    $region32: #{rganet1_forward.1} parent=1 // pred_region
      %s2206 = ssub.s32 256, 256
      %2207 = vsyncadd [#allocation5], %s2206
      %s2208 = sshll.u32 [#allocation8], 4
      %s2209 = int_to_ptr.vmem [resolvable:$true] %s2208
      %2214 = dma.vmem_to_hbm [thread:$0]  %s2209, 256, %s5, [#allocation5], 128, 128, 8
    $region33: #{rganet1_forward.1} parent=1 // pred_fallthru
      _
    // Predicated region
    $region34: #{rganet1_forward.1} parent=1 // pred_check
      _
    $region35: #{rganet1_forward.1} parent=1 // pred_check_branch
      %2216 = sbr.rel (0) target = $region37
    $region36: #{rganet1_forward.1} parent=1 // pred_region
      %2217 = dma.done [#allocation5], 256
    $region37: #{rganet1_forward.1} parent=1 // pred_fallthru
      _
    %2218 = vsyncpa [#allocation4], 1
    %2219 = vsyncpa [#allocation5], 1
    %2220 = vsyncpa [#allocation6], 1

</llo_original>
